<compile_context>
chip_gen: v7x
topology: tpu7x:2x2x1
jax: 0.10.0
libtpu: 0.0.40
codegen_flags: <defaults>
</compile_context>

<pallas_src>
import functools
import jax
import jax.numpy as jnp
from jax import lax
from jax.experimental import pallas as pl
from jax.experimental.pallas import tpu as pltpu


def _layernorm(z, w, b, eps=1e-5):
    # two-pass (mean-subtracted) variance: matches torch LayerNorm numerics and
    # avoids the E[x^2]-mu^2 cancellation concern; same reduction count.
    mu = jnp.mean(z, axis=-1, keepdims=True)
    d = z - mu
    var = jnp.mean(d * d, axis=-1, keepdims=True)
    return d * lax.rsqrt(var + eps) * w + b


def _gelu_exact(z):
    # torch.nn.GELU() default = exact erf-based GELU
    # TODO(synk): on v5e, swap to tanh-GELU (EUP slot) if VALU-bound profiling shows it.
    return 0.5 * z * (1.0 + lax.erf(z * (1.0 / jnp.sqrt(2.0).astype(z.dtype))))


def block_kernel(num_heads,
                 x_ref,
                 ln1w_ref, ln1b_ref, qkvw_ref, projw_ref, projb_ref,
                 ln2w_ref, ln2b_ref, fc1w_ref, fc1b_ref, fc2w_ref, fc2b_ref,
                 out_ref, attn_ref,
                 head_acc_ref):
    x = x_ref[0].astype(jnp.float32)                       # (N, C) f32
    N, C = x.shape
    H = num_heads
    Dh = C // H
    scale = Dh ** (-0.5)

    # ---- norm1 + attention (f32 elementwise, bf16 MXU operands) ------------
    h1 = _layernorm(x, ln1w_ref[0], ln1b_ref[0])           # (N, C) f32
    qkv = jnp.dot(h1.astype(jnp.bfloat16), qkvw_ref[...],  # bf16 x bf16 -> f32
                  preferred_element_type=jnp.float32)      # (N, 3C), no bias
    # fold 1/sqrt(Dh) into q: scales an (N, Dh)-wide tensor, not (N, N) scores
    q = (qkv[:, 0 * C:1 * C] * scale).astype(jnp.bfloat16)
    k = qkv[:, 1 * C:2 * C].astype(jnp.bfloat16)
    v = qkv[:, 2 * C:3 * C].astype(jnp.bfloat16)

    for h in range(H):                                     # static unrolled loop (H is small)
        qh = q[:, h * Dh:(h + 1) * Dh]                     # (N, Dh) bf16
        kh = k[:, h * Dh:(h + 1) * Dh]
        vh = v[:, h * Dh:(h + 1) * Dh]
        # q @ k.T without materializing the transpose
        s = lax.dot_general(qh, kh, (((1,), (1,)), ((), ())),
                            preferred_element_type=jnp.float32)     # (N, N) f32
        s = s - jnp.max(s, axis=-1, keepdims=True)
        e = jnp.exp(s)
        # exact reciprocal: attn is a returned output (rows sum to 1)
        inv = pl.reciprocal(jnp.sum(e, axis=-1, keepdims=True))
        p = e * inv                                        # softmax (f32)
        attn_ref[0, h] = p.astype(attn_ref.dtype)          # bf16 writeback (half DMA)
        pv = jnp.dot(p.astype(jnp.bfloat16), vh,
                     preferred_element_type=jnp.float32)   # (N, Dh) f32 acc
        # lane-dense bf16 scratch: proj matmul reads it with no extra cast
        head_acc_ref[:, h * Dh:(h + 1) * Dh] = pv.astype(head_acc_ref.dtype)

    x_attn = jnp.dot(head_acc_ref[...], projw_ref[...],
                     preferred_element_type=jnp.float32) + projb_ref[0]
    x1 = x + x_attn                                        # residual 1

    # ---- norm2 + MLP -------------------------------------------------------
    h2 = _layernorm(x1, ln2w_ref[0], ln2b_ref[0])
    m = jnp.dot(h2.astype(jnp.bfloat16), fc1w_ref[...],
                preferred_element_type=jnp.float32) + fc1b_ref[0]   # (N, Hd)
    m = _gelu_exact(m)
    m = jnp.dot(m.astype(jnp.bfloat16), fc2w_ref[...],
                preferred_element_type=jnp.float32) + fc2b_ref[0]   # (N, C)
    out_ref[0] = (x1 + m).astype(out_ref.dtype)            # residual 2


_BF16_WEIGHTS = ("qkv_w", "proj_w", "fc1_w", "fc2_w")


def prepare_block_params(params):
    """One-time parameter prep (call at init, NOT per step).

    1-D params -> (1, dim) for 2-D VMEM tiles; matmul weights pre-cast to bf16
    so the per-step HBM->VMEM weight traffic is genuinely halved (no per-call
    XLA cast of the full f32 weights). LN params / biases stay f32.
    """
    prepped = {}
    for name, v in params.items():
        v = jnp.asarray(v)
        if v.ndim == 1:
            v = v.reshape(1, -1)
        if name in _BF16_WEIGHTS:
            v = v.astype(jnp.bfloat16)
        prepped[name] = v
    return prepped


def _vmem_limit_bytes(N, C, Hd, H):
    """Per-generation VMEM budget derived from shapes (not a hard-coded 32 MiB)."""
    f32, bf16 = 4, 2
    weights = bf16 * (C * 3 * C + C * C + 2 * C * Hd)          # single-buffered bf16 weights
    small = 2 * f32 * (5 * C + Hd)                             # LN / bias params (double-buffered)
    x_io = 2 * 2 * f32 * N * C                                 # x in + out blocks (double-buffered)
    attn_io = 2 * bf16 * H * N * N                             # attn out block (double-buffered, bf16)
    scratch = bf16 * N * C                                     # head accumulator
    temps = (f32 * N * 3 * C + bf16 * 3 * N * C + f32 * N * Hd
             + 3 * f32 * N * N + 6 * f32 * N * C)              # in-kernel temporaries (estimate)
    need = weights + small + x_io + attn_io + scratch + temps
    try:
        cap = getattr(pltpu.get_tpu_info(), "vmem_capacity_bytes", 128 * 1024 * 1024)
    except Exception:  # interpret mode / older runtimes
        cap = 128 * 1024 * 1024
    # Generous budget (>= 64 MiB where the 128 MiB v5e/v6e VMEM allows) with
    # ~15% headroom for Mosaic-internal scratch; caps at ~54 MiB on v7x (64 MiB).
    return int(min(cap * 0.85, max(need * 1.5, 64 * 1024 * 1024)))


def _weight_spec(shape):
    """Constant-index weight input: single-buffer it (re-fetch never happens,
    but Pallas would otherwise allocate 2 buffers -> 2x resident weight VMEM)."""
    index_map = lambda b, _n=len(shape): (0,) * _n
    if hasattr(pl, "Buffered"):
        try:
            return pl.BlockSpec(shape, index_map, pipeline_mode=pl.Buffered(1))
        except TypeError:  # older BlockSpec without pipeline_mode
            pass
    return pl.BlockSpec(shape, index_map)


def vit_block(x, prepped, num_heads, *, attn_dtype=jnp.bfloat16):
    """x: (B, N, C) f32; prepped: output of prepare_block_params (called once)."""
    B, N, C = x.shape
    Hd = prepped["fc1_w"].shape[1]
    H = num_heads

    def rep0(ndim):
        return lambda b: (0,) * ndim

    in_specs = [
        pl.BlockSpec((1, N, C), lambda b: (b, 0, 0)),                 # x
        pl.BlockSpec((1, C), rep0(2)),                                # ln1 w
        pl.BlockSpec((1, C), rep0(2)),                                # ln1 b
        _weight_spec((C, 3 * C)),                                     # qkv w (bf16, 1-buffered)
        _weight_spec((C, C)),                                         # proj w (bf16, 1-buffered)
        pl.BlockSpec((1, C), rep0(2)),                                # proj b
        pl.BlockSpec((1, C), rep0(2)),                                # ln2 w
        pl.BlockSpec((1, C), rep0(2)),                                # ln2 b
        _weight_spec((C, Hd)),                                        # fc1 w (bf16, 1-buffered)
        pl.BlockSpec((1, Hd), rep0(2)),                               # fc1 b
        _weight_spec((Hd, C)),                                        # fc2 w (bf16, 1-buffered)
        pl.BlockSpec((1, C), rep0(2)),                                # fc2 b
    ]
    out_specs = [
        pl.BlockSpec((1, N, C), lambda b: (b, 0, 0)),                 # x out (f32)
        pl.BlockSpec((1, H, N, N), lambda b: (b, 0, 0, 0)),           # attn (bf16)
    ]
    out_shape = (
        jax.ShapeDtypeStruct((B, N, C), jnp.float32),
        jax.ShapeDtypeStruct((B, H, N, N), attn_dtype),
    )

    grid_spec = pltpu.PrefetchScalarGridSpec(
        num_scalar_prefetch=0,
        grid=(B,),
        in_specs=in_specs,
        out_specs=out_specs,
        scratch_shapes=[pltpu.VMEM((N, C), jnp.bfloat16)],            # head acc (bf16)
    )

    fn = pl.pallas_call(
        functools.partial(block_kernel, num_heads),
        grid_spec=grid_spec,
        out_shape=out_shape,
        compiler_params=pltpu.CompilerParams(
            dimension_semantics=("parallel",),
            vmem_limit_bytes=_vmem_limit_bytes(N, C, Hd, H),
        ),
    )
    return fn(
        x,
        prepped["ln1_w"], prepped["ln1_b"], prepped["qkv_w"], prepped["proj_w"],
        prepped["proj_b"], prepped["ln2_w"], prepped["ln2_b"], prepped["fc1_w"],
        prepped["fc1_b"], prepped["fc2_w"], prepped["fc2_b"],
    )


# ---------------- pure-JAX reference (for verification) ----------------------
def _ref_layernorm(z, w, b, eps=1e-5):
    mu = jnp.mean(z, axis=-1, keepdims=True)
    var = jnp.mean((z - mu) ** 2, axis=-1, keepdims=True)
    return (z - mu) * lax.rsqrt(var + eps) * w + b


def ref_block(x, params, num_heads):
    B, N, C = x.shape
    H = num_heads
    Dh = C // H
    scale = Dh ** (-0.5)

    h1 = _ref_layernorm(x, params["ln1_w"], params["ln1_b"])
    qkv = h1 @ params["qkv_w"]                              # (B, N, 3C)
    qkv = qkv.reshape(B, N, 3, H, Dh).transpose(2, 0, 3, 1, 4)
    q, k, v = qkv[0], qkv[1], qkv[2]                        # (B, H, N, Dh)
    attn = jnp.einsum("bhnd,bhmd->bhnm", q, k) * scale
    attn = jax.nn.softmax(attn, axis=-1)
    o = jnp.einsum("bhnm,bhmd->bhnd", attn, v)
    o = o.transpose(0, 2, 1, 3).reshape(B, N, C)
    o = o @ params["proj_w"] + params["proj_b"]
    x1 = x + o
    h2 = _ref_layernorm(x1, params["ln2_w"], params["ln2_b"])
    m = _gelu_exact(h2 @ params["fc1_w"] + params["fc1_b"])
    m = m @ params["fc2_w"] + params["fc2_b"]
    return x1 + m, attn


def make_params(key, dim, mlp_hidden):
    ks = jax.random.split(key, 6)
    std = 0.02
    return {
        "ln1_w": jnp.ones((dim,), jnp.float32),
        "ln1_b": jnp.zeros((dim,), jnp.float32),
        "qkv_w": std * jax.random.normal(ks[0], (dim, 3 * dim), jnp.float32),
        "proj_w": std * jax.random.normal(ks[1], (dim, dim), jnp.float32),
        "proj_b": std * jax.random.normal(ks[2], (dim,), jnp.float32),
        "ln2_w": jnp.ones((dim,), jnp.float32),
        "ln2_b": jnp.zeros((dim,), jnp.float32),
        "fc1_w": std * jax.random.normal(ks[3], (dim, mlp_hidden), jnp.float32),
        "fc1_b": jnp.zeros((mlp_hidden,), jnp.float32),
        "fc2_w": std * jax.random.normal(ks[4], (mlp_hidden, dim), jnp.float32),
        "fc2_b": jnp.zeros((dim,), jnp.float32),
    }


if __name__ == "__main__":
    # NOTE: toy shapes for the correctness check only (per-grid-step overhead &
    # lane underfill dominate here); benchmark at real ViT dims (N~197, C=768).
    B, N, C = 2, 8, 32
    num_heads = 4
    mlp_hidden = int(C * 4.0)

    key = jax.random.PRNGKey(0)
    kx, kp = jax.random.split(key)
    x = jax.random.normal(kx, (B, N, C), jnp.float32)
    params = make_params(kp, C, mlp_hidden)

    prepped = prepare_block_params(params)   # one-time prep, outside the step path
    out, attn = vit_block(x, prepped, num_heads)
    out = jax.block_until_ready(out)
    attn = jax.block_until_ready(attn)

    out_ref, attn_ref = ref_block(x, params, num_heads)
    assert out.shape == (B, N, C) and attn.shape == (B, num_heads, N, N)
    # bf16 matmul operands / bf16 attn output -> slightly looser tolerances
    assert jnp.allclose(out, out_ref, rtol=2e-2, atol=2e-2), "output mismatch"
    assert jnp.allclose(attn.astype(jnp.float32), attn_ref, rtol=2e-2, atol=2e-2), "attn mismatch"

    print("KERNEL_OK")
</pallas_src>

<mosaic_0001>
module attributes {stable_mosaic.version = 11 : i64} {
  func.func @block_kernel(%arg0: i32, %arg1: memref<1x8x32xf32, #tpu.memory_space<vmem>>, %arg2: memref<1x32xf32, #tpu.memory_space<vmem>>, %arg3: memref<1x32xf32, #tpu.memory_space<vmem>>, %arg4: memref<32x96xbf16, #tpu.memory_space<vmem>>, %arg5: memref<32x32xbf16, #tpu.memory_space<vmem>>, %arg6: memref<1x32xf32, #tpu.memory_space<vmem>>, %arg7: memref<1x32xf32, #tpu.memory_space<vmem>>, %arg8: memref<1x32xf32, #tpu.memory_space<vmem>>, %arg9: memref<32x128xbf16, #tpu.memory_space<vmem>>, %arg10: memref<1x128xf32, #tpu.memory_space<vmem>>, %arg11: memref<128x32xbf16, #tpu.memory_space<vmem>>, %arg12: memref<1x32xf32, #tpu.memory_space<vmem>>, %arg13: memref<1x8x32xf32, #tpu.memory_space<vmem>>, %arg14: memref<1x4x8x8xbf16, #tpu.memory_space<vmem>>, %arg15: memref<8x32xbf16, #tpu.memory_space<vmem>>) attributes {dimension_semantics = [#tpu.dimension_semantics<parallel>], iteration_bounds = array<i64: 2>, scalar_prefetch = 0 : i64, scratch_operands = 1 : i64, tpu.core_type = #tpu.core_type<tc>, window_params = [{transform_indices = @transform_0, window_bounds = array<i64: 1, 8, 32>}, {pipeline_mode = #tpu.pipeline_mode<synchronous>, transform_indices = @transform_1, window_bounds = array<i64: 1, 32>}, {pipeline_mode = #tpu.pipeline_mode<synchronous>, transform_indices = @transform_2, window_bounds = array<i64: 1, 32>}, {pipeline_mode = #tpu.pipeline_mode<synchronous>, transform_indices = @transform_3, window_bounds = array<i64: 32, 96>}, {pipeline_mode = #tpu.pipeline_mode<synchronous>, transform_indices = @transform_4, window_bounds = array<i64: 32, 32>}, {pipeline_mode = #tpu.pipeline_mode<synchronous>, transform_indices = @transform_5, window_bounds = array<i64: 1, 32>}, {pipeline_mode = #tpu.pipeline_mode<synchronous>, transform_indices = @transform_6, window_bounds = array<i64: 1, 32>}, {pipeline_mode = #tpu.pipeline_mode<synchronous>, transform_indices = @transform_7, window_bounds = array<i64: 1, 32>}, {pipeline_mode = #tpu.pipeline_mode<synchronous>, transform_indices = @transform_8, window_bounds = array<i64: 32, 128>}, {pipeline_mode = #tpu.pipeline_mode<synchronous>, transform_indices = @transform_9, window_bounds = array<i64: 1, 128>}, {pipeline_mode = #tpu.pipeline_mode<synchronous>, transform_indices = @transform_10, window_bounds = array<i64: 128, 32>}, {pipeline_mode = #tpu.pipeline_mode<synchronous>, transform_indices = @transform_11, window_bounds = array<i64: 1, 32>}, {transform_indices = @transform_12, window_bounds = array<i64: 1, 8, 32>}, {transform_indices = @transform_13, window_bounds = array<i64: 1, 4, 8, 8>}]} {
    %c0 = arith.constant 0 : index
    %c0_0 = arith.constant 0 : index
    %c0_1 = arith.constant 0 : index
    %0 = vector.load %arg1[%c0, %c0_0, %c0_1] : memref<1x8x32xf32, #tpu.memory_space<vmem>>, vector<1x8x32xf32>
    %1 = vector.shape_cast %0 : vector<1x8x32xf32> to vector<8x32xf32>
    %c0_2 = arith.constant 0 : index
    %c0_3 = arith.constant 0 : index
    %2 = vector.load %arg2[%c0_2, %c0_3] : memref<1x32xf32, #tpu.memory_space<vmem>>, vector<1x32xf32>
    %3 = vector.shape_cast %2 : vector<1x32xf32> to vector<32xf32>
    %c0_4 = arith.constant 0 : index
    %c0_5 = arith.constant 0 : index
    %4 = vector.load %arg3[%c0_4, %c0_5] : memref<1x32xf32, #tpu.memory_space<vmem>>, vector<1x32xf32>
    %5 = vector.shape_cast %4 : vector<1x32xf32> to vector<32xf32>
    %cst = arith.constant dense<0.000000e+00> : vector<8xf32>
    %6 = vector.multi_reduction <add>, %1, %cst [1] : vector<8x32xf32> to vector<8xf32>
    %7 = vector.shape_cast %6 : vector<8xf32> to vector<8x1xf32>
    %cst_6 = arith.constant 3.200000e+01 : f32
    %8 = vector.broadcast %cst_6 : f32 to vector<8x1xf32>
    %9 = arith.divf %7, %8 : vector<8x1xf32>
    %10 = vector.broadcast %9 : vector<8x1xf32> to vector<8x32xf32>
    %11 = arith.subf %1, %10 : vector<8x32xf32>
    %12 = arith.mulf %11, %11 : vector<8x32xf32>
    %cst_7 = arith.constant dense<0.000000e+00> : vector<8xf32>
    %13 = vector.multi_reduction <add>, %12, %cst_7 [1] : vector<8x32xf32> to vector<8xf32>
    %14 = vector.shape_cast %13 : vector<8xf32> to vector<8x1xf32>
    %cst_8 = arith.constant 3.200000e+01 : f32
    %15 = vector.broadcast %cst_8 : f32 to vector<8x1xf32>
    %16 = arith.divf %14, %15 : vector<8x1xf32>
    %cst_9 = arith.constant 9.99999974E-6 : f32
    %17 = vector.broadcast %cst_9 : f32 to vector<8x1xf32>
    %18 = arith.addf %16, %17 : vector<8x1xf32>
    %19 = math.rsqrt %18 : vector<8x1xf32>
    %20 = vector.broadcast %19 : vector<8x1xf32> to vector<8x32xf32>
    %21 = arith.mulf %11, %20 : vector<8x32xf32>
    %22 = vector.shape_cast %3 : vector<32xf32> to vector<1x32xf32>
    %23 = vector.broadcast %22 : vector<1x32xf32> to vector<8x32xf32>
    %24 = arith.mulf %21, %23 : vector<8x32xf32>
    %25 = vector.shape_cast %5 : vector<32xf32> to vector<1x32xf32>
    %26 = vector.broadcast %25 : vector<1x32xf32> to vector<8x32xf32>
    %27 = arith.addf %24, %26 : vector<8x32xf32>
    %28 = arith.truncf %27 : vector<8x32xf32> to vector<8x32xbf16>
    %c0_10 = arith.constant 0 : index
    %c0_11 = arith.constant 0 : index
    %29 = vector.load %arg4[%c0_10, %c0_11] : memref<32x96xbf16, #tpu.memory_space<vmem>>, vector<32x96xbf16>
    %cst_12 = arith.constant dense<0.000000e+00> : vector<8x96xf32>
    %30 = tpu.matmul %28, %29, %cst_12 {dimension_numbers = #tpu.dot_dimension_numbers<[1], [0], [0], [1], [0, 0, 1, 1], [], []>} : vector<8x32xbf16>, vector<32x96xbf16>, vector<8x96xf32> -> vector<8x96xf32>
    %31 = vector.extract_strided_slice %30 {offsets = [0, 0], sizes = [8, 32], strides = [1, 1]} : vector<8x96xf32> to vector<8x32xf32>
    %cst_13 = arith.constant 0.353553385 : f32
    %32 = vector.broadcast %cst_13 : f32 to vector<8x32xf32>
    %33 = arith.mulf %31, %32 : vector<8x32xf32>
    %34 = arith.truncf %33 : vector<8x32xf32> to vector<8x32xbf16>
    %35 = vector.extract_strided_slice %30 {offsets = [0, 32], sizes = [8, 32], strides = [1, 1]} : vector<8x96xf32> to vector<8x32xf32>
    %36 = arith.truncf %35 : vector<8x32xf32> to vector<8x32xbf16>
    %37 = vector.extract_strided_slice %30 {offsets = [0, 64], sizes = [8, 32], strides = [1, 1]} : vector<8x96xf32> to vector<8x32xf32>
    %38 = arith.truncf %37 : vector<8x32xf32> to vector<8x32xbf16>
    %39 = vector.extract_strided_slice %34 {offsets = [0, 0], sizes = [8, 8], strides = [1, 1]} : vector<8x32xbf16> to vector<8x8xbf16>
    %40 = vector.extract_strided_slice %36 {offsets = [0, 0], sizes = [8, 8], strides = [1, 1]} : vector<8x32xbf16> to vector<8x8xbf16>
    %41 = vector.extract_strided_slice %38 {offsets = [0, 0], sizes = [8, 8], strides = [1, 1]} : vector<8x32xbf16> to vector<8x8xbf16>
    %cst_14 = arith.constant dense<0.000000e+00> : vector<8x8xf32>
    %42 = tpu.matmul %39, %40, %cst_14 {dimension_numbers = #tpu.dot_dimension_numbers<[1], [1], [0], [0], [0, 0, 1, 0], [], []>} : vector<8x8xbf16>, vector<8x8xbf16>, vector<8x8xf32> -> vector<8x8xf32>
    %cst_15 = arith.constant dense<0xFF800000> : vector<8xf32>
    %43 = vector.multi_reduction <maximumf>, %42, %cst_15 [1] : vector<8x8xf32> to vector<8xf32>
    %44 = vector.shape_cast %43 : vector<8xf32> to vector<8x1xf32>
    %45 = vector.broadcast %44 : vector<8x1xf32> to vector<8x8xf32>
    %46 = arith.subf %42, %45 : vector<8x8xf32>
    %47 = math.exp %46 : vector<8x8xf32>
    %cst_16 = arith.constant dense<0.000000e+00> : vector<8xf32>
    %48 = vector.multi_reduction <add>, %47, %cst_16 [1] : vector<8x8xf32> to vector<8xf32>
    %49 = vector.shape_cast %48 : vector<8xf32> to vector<8x1xf32>
    %50 = tpu.reciprocal %49 : vector<8x1xf32> -> vector<8x1xf32>
    %51 = vector.broadcast %50 : vector<8x1xf32> to vector<8x8xf32>
    %52 = arith.mulf %47, %51 : vector<8x8xf32>
    %53 = arith.truncf %52 : vector<8x8xf32> to vector<8x8xbf16>
    %c0_17 = arith.constant 0 : index
    %c0_18 = arith.constant 0 : index
    %c0_19 = arith.constant 0 : index
    %c0_20 = arith.constant 0 : index
    %54 = vector.load %arg14[%c0_17, %c0_18, %c0_19, %c0_20] : memref<1x4x8x8xbf16, #tpu.memory_space<vmem>>, vector<1x1x8x8xbf16>
    %55 = vector.shape_cast %54 : vector<1x1x8x8xbf16> to vector<8x8xbf16>
    %56 = vector.shape_cast %53 : vector<8x8xbf16> to vector<1x1x8x8xbf16>
    tpu.vector_store %arg14[%c0_17, %c0_18, %c0_19, %c0_20], %56 {strides = array<i32>} : memref<1x4x8x8xbf16, #tpu.memory_space<vmem>>, vector<1x1x8x8xbf16>,
    %57 = arith.truncf %52 : vector<8x8xf32> to vector<8x8xbf16>
    %cst_21 = arith.constant dense<0.000000e+00> : vector<8x8xf32>
    %58 = tpu.matmul %57, %41, %cst_21 {dimension_numbers = #tpu.dot_dimension_numbers<[1], [0], [0], [1], [0, 0, 1, 1], [], []>} : vector<8x8xbf16>, vector<8x8xbf16>, vector<8x8xf32> -> vector<8x8xf32>
    %59 = arith.truncf %58 : vector<8x8xf32> to vector<8x8xbf16>
    %c0_22 = arith.constant 0 : index
    %c0_23 = arith.constant 0 : index
    %60 = vector.load %arg15[%c0_22, %c0_23] : memref<8x32xbf16, #tpu.memory_space<vmem>>, vector<8x8xbf16>
    tpu.vector_store %arg15[%c0_22, %c0_23], %59 {strides = array<i32>} : memref<8x32xbf16, #tpu.memory_space<vmem>>, vector<8x8xbf16>,
    %61 = vector.extract_strided_slice %34 {offsets = [0, 8], sizes = [8, 8], strides = [1, 1]} : vector<8x32xbf16> to vector<8x8xbf16>
    %62 = vector.extract_strided_slice %36 {offsets = [0, 8], sizes = [8, 8], strides = [1, 1]} : vector<8x32xbf16> to vector<8x8xbf16>
    %63 = vector.extract_strided_slice %38 {offsets = [0, 8], sizes = [8, 8], strides = [1, 1]} : vector<8x32xbf16> to vector<8x8xbf16>
    %cst_24 = arith.constant dense<0.000000e+00> : vector<8x8xf32>
    %64 = tpu.matmul %61, %62, %cst_24 {dimension_numbers = #tpu.dot_dimension_numbers<[1], [1], [0], [0], [0, 0, 1, 0], [], []>} : vector<8x8xbf16>, vector<8x8xbf16>, vector<8x8xf32> -> vector<8x8xf32>
    %cst_25 = arith.constant dense<0xFF800000> : vector<8xf32>
    %65 = vector.multi_reduction <maximumf>, %64, %cst_25 [1] : vector<8x8xf32> to vector<8xf32>
    %66 = vector.shape_cast %65 : vector<8xf32> to vector<8x1xf32>
    %67 = vector.broadcast %66 : vector<8x1xf32> to vector<8x8xf32>
    %68 = arith.subf %64, %67 : vector<8x8xf32>
    %69 = math.exp %68 : vector<8x8xf32>
    %cst_26 = arith.constant dense<0.000000e+00> : vector<8xf32>
    %70 = vector.multi_reduction <add>, %69, %cst_26 [1] : vector<8x8xf32> to vector<8xf32>
    %71 = vector.shape_cast %70 : vector<8xf32> to vector<8x1xf32>
    %72 = tpu.reciprocal %71 : vector<8x1xf32> -> vector<8x1xf32>
    %73 = vector.broadcast %72 : vector<8x1xf32> to vector<8x8xf32>
    %74 = arith.mulf %69, %73 : vector<8x8xf32>
    %75 = arith.truncf %74 : vector<8x8xf32> to vector<8x8xbf16>
    %c0_27 = arith.constant 0 : index
    %c1 = arith.constant 1 : index
    %c0_28 = arith.constant 0 : index
    %c0_29 = arith.constant 0 : index
    %76 = vector.load %arg14[%c0_27, %c1, %c0_28, %c0_29] : memref<1x4x8x8xbf16, #tpu.memory_space<vmem>>, vector<1x1x8x8xbf16>
    %77 = vector.shape_cast %76 : vector<1x1x8x8xbf16> to vector<8x8xbf16>
    %78 = vector.shape_cast %75 : vector<8x8xbf16> to vector<1x1x8x8xbf16>
    tpu.vector_store %arg14[%c0_27, %c1, %c0_28, %c0_29], %78 {strides = array<i32>} : memref<1x4x8x8xbf16, #tpu.memory_space<vmem>>, vector<1x1x8x8xbf16>,
    %79 = arith.truncf %74 : vector<8x8xf32> to vector<8x8xbf16>
    %cst_30 = arith.constant dense<0.000000e+00> : vector<8x8xf32>
    %80 = tpu.matmul %79, %63, %cst_30 {dimension_numbers = #tpu.dot_dimension_numbers<[1], [0], [0], [1], [0, 0, 1, 1], [], []>} : vector<8x8xbf16>, vector<8x8xbf16>, vector<8x8xf32> -> vector<8x8xf32>
    %81 = arith.truncf %80 : vector<8x8xf32> to vector<8x8xbf16>
    %c0_31 = arith.constant 0 : index
    %c8 = arith.constant 8 : index
    %82 = vector.load %arg15[%c0_31, %c8] : memref<8x32xbf16, #tpu.memory_space<vmem>>, vector<8x8xbf16>
    tpu.vector_store %arg15[%c0_31, %c8], %81 {strides = array<i32>} : memref<8x32xbf16, #tpu.memory_space<vmem>>, vector<8x8xbf16>,
    %83 = vector.extract_strided_slice %34 {offsets = [0, 16], sizes = [8, 8], strides = [1, 1]} : vector<8x32xbf16> to vector<8x8xbf16>
    %84 = vector.extract_strided_slice %36 {offsets = [0, 16], sizes = [8, 8], strides = [1, 1]} : vector<8x32xbf16> to vector<8x8xbf16>
    %85 = vector.extract_strided_slice %38 {offsets = [0, 16], sizes = [8, 8], strides = [1, 1]} : vector<8x32xbf16> to vector<8x8xbf16>
    %cst_32 = arith.constant dense<0.000000e+00> : vector<8x8xf32>
    %86 = tpu.matmul %83, %84, %cst_32 {dimension_numbers = #tpu.dot_dimension_numbers<[1], [1], [0], [0], [0, 0, 1, 0], [], []>} : vector<8x8xbf16>, vector<8x8xbf16>, vector<8x8xf32> -> vector<8x8xf32>
    %cst_33 = arith.constant dense<0xFF800000> : vector<8xf32>
    %87 = vector.multi_reduction <maximumf>, %86, %cst_33 [1] : vector<8x8xf32> to vector<8xf32>
    %88 = vector.shape_cast %87 : vector<8xf32> to vector<8x1xf32>
    %89 = vector.broadcast %88 : vector<8x1xf32> to vector<8x8xf32>
    %90 = arith.subf %86, %89 : vector<8x8xf32>
    %91 = math.exp %90 : vector<8x8xf32>
    %cst_34 = arith.constant dense<0.000000e+00> : vector<8xf32>
    %92 = vector.multi_reduction <add>, %91, %cst_34 [1] : vector<8x8xf32> to vector<8xf32>
    %93 = vector.shape_cast %92 : vector<8xf32> to vector<8x1xf32>
    %94 = tpu.reciprocal %93 : vector<8x1xf32> -> vector<8x1xf32>
    %95 = vector.broadcast %94 : vector<8x1xf32> to vector<8x8xf32>
    %96 = arith.mulf %91, %95 : vector<8x8xf32>
    %97 = arith.truncf %96 : vector<8x8xf32> to vector<8x8xbf16>
    %c0_35 = arith.constant 0 : index
    %c2 = arith.constant 2 : index
    %c0_36 = arith.constant 0 : index
    %c0_37 = arith.constant 0 : index
    %98 = vector.load %arg14[%c0_35, %c2, %c0_36, %c0_37] : memref<1x4x8x8xbf16, #tpu.memory_space<vmem>>, vector<1x1x8x8xbf16>
    %99 = vector.shape_cast %98 : vector<1x1x8x8xbf16> to vector<8x8xbf16>
    %100 = vector.shape_cast %97 : vector<8x8xbf16> to vector<1x1x8x8xbf16>
    tpu.vector_store %arg14[%c0_35, %c2, %c0_36, %c0_37], %100 {strides = array<i32>} : memref<1x4x8x8xbf16, #tpu.memory_space<vmem>>, vector<1x1x8x8xbf16>,
    %101 = arith.truncf %96 : vector<8x8xf32> to vector<8x8xbf16>
    %cst_38 = arith.constant dense<0.000000e+00> : vector<8x8xf32>
    %102 = tpu.matmul %101, %85, %cst_38 {dimension_numbers = #tpu.dot_dimension_numbers<[1], [0], [0], [1], [0, 0, 1, 1], [], []>} : vector<8x8xbf16>, vector<8x8xbf16>, vector<8x8xf32> -> vector<8x8xf32>
    %103 = arith.truncf %102 : vector<8x8xf32> to vector<8x8xbf16>
    %c0_39 = arith.constant 0 : index
    %c16 = arith.constant 16 : index
    %104 = vector.load %arg15[%c0_39, %c16] : memref<8x32xbf16, #tpu.memory_space<vmem>>, vector<8x8xbf16>
    tpu.vector_store %arg15[%c0_39, %c16], %103 {strides = array<i32>} : memref<8x32xbf16, #tpu.memory_space<vmem>>, vector<8x8xbf16>,
    %105 = vector.extract_strided_slice %34 {offsets = [0, 24], sizes = [8, 8], strides = [1, 1]} : vector<8x32xbf16> to vector<8x8xbf16>
    %106 = vector.extract_strided_slice %36 {offsets = [0, 24], sizes = [8, 8], strides = [1, 1]} : vector<8x32xbf16> to vector<8x8xbf16>
    %107 = vector.extract_strided_slice %38 {offsets = [0, 24], sizes = [8, 8], strides = [1, 1]} : vector<8x32xbf16> to vector<8x8xbf16>
    %cst_40 = arith.constant dense<0.000000e+00> : vector<8x8xf32>
    %108 = tpu.matmul %105, %106, %cst_40 {dimension_numbers = #tpu.dot_dimension_numbers<[1], [1], [0], [0], [0, 0, 1, 0], [], []>} : vector<8x8xbf16>, vector<8x8xbf16>, vector<8x8xf32> -> vector<8x8xf32>
    %cst_41 = arith.constant dense<0xFF800000> : vector<8xf32>
    %109 = vector.multi_reduction <maximumf>, %108, %cst_41 [1] : vector<8x8xf32> to vector<8xf32>
    %110 = vector.shape_cast %109 : vector<8xf32> to vector<8x1xf32>
    %111 = vector.broadcast %110 : vector<8x1xf32> to vector<8x8xf32>
    %112 = arith.subf %108, %111 : vector<8x8xf32>
    %113 = math.exp %112 : vector<8x8xf32>
    %cst_42 = arith.constant dense<0.000000e+00> : vector<8xf32>
    %114 = vector.multi_reduction <add>, %113, %cst_42 [1] : vector<8x8xf32> to vector<8xf32>
    %115 = vector.shape_cast %114 : vector<8xf32> to vector<8x1xf32>
    %116 = tpu.reciprocal %115 : vector<8x1xf32> -> vector<8x1xf32>
    %117 = vector.broadcast %116 : vector<8x1xf32> to vector<8x8xf32>
    %118 = arith.mulf %113, %117 : vector<8x8xf32>
    %119 = arith.truncf %118 : vector<8x8xf32> to vector<8x8xbf16>
    %c0_43 = arith.constant 0 : index
    %c3 = arith.constant 3 : index
    %c0_44 = arith.constant 0 : index
    %c0_45 = arith.constant 0 : index
    %120 = vector.load %arg14[%c0_43, %c3, %c0_44, %c0_45] : memref<1x4x8x8xbf16, #tpu.memory_space<vmem>>, vector<1x1x8x8xbf16>
    %121 = vector.shape_cast %120 : vector<1x1x8x8xbf16> to vector<8x8xbf16>
    %122 = vector.shape_cast %119 : vector<8x8xbf16> to vector<1x1x8x8xbf16>
    tpu.vector_store %arg14[%c0_43, %c3, %c0_44, %c0_45], %122 {strides = array<i32>} : memref<1x4x8x8xbf16, #tpu.memory_space<vmem>>, vector<1x1x8x8xbf16>,
    %123 = arith.truncf %118 : vector<8x8xf32> to vector<8x8xbf16>
    %cst_46 = arith.constant dense<0.000000e+00> : vector<8x8xf32>
    %124 = tpu.matmul %123, %107, %cst_46 {dimension_numbers = #tpu.dot_dimension_numbers<[1], [0], [0], [1], [0, 0, 1, 1], [], []>} : vector<8x8xbf16>, vector<8x8xbf16>, vector<8x8xf32> -> vector<8x8xf32>
    %125 = arith.truncf %124 : vector<8x8xf32> to vector<8x8xbf16>
    %c0_47 = arith.constant 0 : index
    %c24 = arith.constant 24 : index
    %126 = vector.load %arg15[%c0_47, %c24] : memref<8x32xbf16, #tpu.memory_space<vmem>>, vector<8x8xbf16>
    tpu.vector_store %arg15[%c0_47, %c24], %125 {strides = array<i32>} : memref<8x32xbf16, #tpu.memory_space<vmem>>, vector<8x8xbf16>,
    %c0_48 = arith.constant 0 : index
    %c0_49 = arith.constant 0 : index
    %127 = vector.load %arg15[%c0_48, %c0_49] : memref<8x32xbf16, #tpu.memory_space<vmem>>, vector<8x32xbf16>
    %c0_50 = arith.constant 0 : index
    %c0_51 = arith.constant 0 : index
    %128 = vector.load %arg5[%c0_50, %c0_51] : memref<32x32xbf16, #tpu.memory_space<vmem>>, vector<32x32xbf16>
    %cst_52 = arith.constant dense<0.000000e+00> : vector<8x32xf32>
    %129 = tpu.matmul %127, %128, %cst_52 {dimension_numbers = #tpu.dot_dimension_numbers<[1], [0], [0], [1], [0, 0, 1, 1], [], []>} : vector<8x32xbf16>, vector<32x32xbf16>, vector<8x32xf32> -> vector<8x32xf32>
    %c0_53 = arith.constant 0 : index
    %c0_54 = arith.constant 0 : index
    %130 = vector.load %arg6[%c0_53, %c0_54] : memref<1x32xf32, #tpu.memory_space<vmem>>, vector<1x32xf32>
    %131 = vector.shape_cast %130 : vector<1x32xf32> to vector<32xf32>
    %132 = vector.shape_cast %131 : vector<32xf32> to vector<1x32xf32>
    %133 = vector.broadcast %132 : vector<1x32xf32> to vector<8x32xf32>
    %134 = arith.addf %129, %133 : vector<8x32xf32>
    %135 = arith.addf %1, %134 : vector<8x32xf32>
    %c0_55 = arith.constant 0 : index
    %c0_56 = arith.constant 0 : index
    %136 = vector.load %arg7[%c0_55, %c0_56] : memref<1x32xf32, #tpu.memory_space<vmem>>, vector<1x32xf32>
    %137 = vector.shape_cast %136 : vector<1x32xf32> to vector<32xf32>
    %c0_57 = arith.constant 0 : index
    %c0_58 = arith.constant 0 : index
    %138 = vector.load %arg8[%c0_57, %c0_58] : memref<1x32xf32, #tpu.memory_space<vmem>>, vector<1x32xf32>
    %139 = vector.shape_cast %138 : vector<1x32xf32> to vector<32xf32>
    %cst_59 = arith.constant dense<0.000000e+00> : vector<8xf32>
    %140 = vector.multi_reduction <add>, %135, %cst_59 [1] : vector<8x32xf32> to vector<8xf32>
    %141 = vector.shape_cast %140 : vector<8xf32> to vector<8x1xf32>
    %cst_60 = arith.constant 3.200000e+01 : f32
    %142 = vector.broadcast %cst_60 : f32 to vector<8x1xf32>
    %143 = arith.divf %141, %142 : vector<8x1xf32>
    %144 = vector.broadcast %143 : vector<8x1xf32> to vector<8x32xf32>
    %145 = arith.subf %135, %144 : vector<8x32xf32>
    %146 = arith.mulf %145, %145 : vector<8x32xf32>
    %cst_61 = arith.constant dense<0.000000e+00> : vector<8xf32>
    %147 = vector.multi_reduction <add>, %146, %cst_61 [1] : vector<8x32xf32> to vector<8xf32>
    %148 = vector.shape_cast %147 : vector<8xf32> to vector<8x1xf32>
    %cst_62 = arith.constant 3.200000e+01 : f32
    %149 = vector.broadcast %cst_62 : f32 to vector<8x1xf32>
    %150 = arith.divf %148, %149 : vector<8x1xf32>
    %cst_63 = arith.constant 9.99999974E-6 : f32
    %151 = vector.broadcast %cst_63 : f32 to vector<8x1xf32>
    %152 = arith.addf %150, %151 : vector<8x1xf32>
    %153 = math.rsqrt %152 : vector<8x1xf32>
    %154 = vector.broadcast %153 : vector<8x1xf32> to vector<8x32xf32>
    %155 = arith.mulf %145, %154 : vector<8x32xf32>
    %156 = vector.shape_cast %137 : vector<32xf32> to vector<1x32xf32>
    %157 = vector.broadcast %156 : vector<1x32xf32> to vector<8x32xf32>
    %158 = arith.mulf %155, %157 : vector<8x32xf32>
    %159 = vector.shape_cast %139 : vector<32xf32> to vector<1x32xf32>
    %160 = vector.broadcast %159 : vector<1x32xf32> to vector<8x32xf32>
    %161 = arith.addf %158, %160 : vector<8x32xf32>
    %162 = arith.truncf %161 : vector<8x32xf32> to vector<8x32xbf16>
    %c0_64 = arith.constant 0 : index
    %c0_65 = arith.constant 0 : index
    %163 = vector.load %arg9[%c0_64, %c0_65] : memref<32x128xbf16, #tpu.memory_space<vmem>>, vector<32x128xbf16>
    %cst_66 = arith.constant dense<0.000000e+00> : vector<8x128xf32>
    %164 = tpu.matmul %162, %163, %cst_66 {dimension_numbers = #tpu.dot_dimension_numbers<[1], [0], [0], [1], [0, 0, 1, 1], [], []>} : vector<8x32xbf16>, vector<32x128xbf16>, vector<8x128xf32> -> vector<8x128xf32>
    %c0_67 = arith.constant 0 : index
    %c0_68 = arith.constant 0 : index
    %165 = vector.load %arg10[%c0_67, %c0_68] : memref<1x128xf32, #tpu.memory_space<vmem>>, vector<1x128xf32>
    %166 = vector.shape_cast %165 : vector<1x128xf32> to vector<128xf32>
    %167 = vector.shape_cast %166 : vector<128xf32> to vector<1x128xf32>
    %168 = vector.broadcast %167 : vector<1x128xf32> to vector<8x128xf32>
    %169 = arith.addf %164, %168 : vector<8x128xf32>
    %cst_69 = arith.constant 5.000000e-01 : f32
    %170 = vector.broadcast %cst_69 : f32 to vector<8x128xf32>
    %171 = arith.mulf %170, %169 : vector<8x128xf32>
    %cst_70 = arith.constant 2.000000e+00 : f32
    %172 = math.sqrt %cst_70 : f32
    %cst_71 = arith.constant 1.000000e+00 : f32
    %173 = arith.divf %cst_71, %172 : f32
    %174 = vector.broadcast %173 : f32 to vector<8x128xf32>
    %175 = arith.mulf %169, %174 : vector<8x128xf32>
    %176 = math.erf %175 : vector<8x128xf32>
    %cst_72 = arith.constant 1.000000e+00 : f32
    %177 = vector.broadcast %cst_72 : f32 to vector<8x128xf32>
    %178 = arith.addf %177, %176 : vector<8x128xf32>
    %179 = arith.mulf %171, %178 : vector<8x128xf32>
    %180 = arith.truncf %179 : vector<8x128xf32> to vector<8x128xbf16>
    %c0_73 = arith.constant 0 : index
    %c0_74 = arith.constant 0 : index
    %181 = vector.load %arg11[%c0_73, %c0_74] : memref<128x32xbf16, #tpu.memory_space<vmem>>, vector<128x32xbf16>
    %cst_75 = arith.constant dense<0.000000e+00> : vector<8x32xf32>
    %182 = tpu.matmul %180, %181, %cst_75 {dimension_numbers = #tpu.dot_dimension_numbers<[1], [0], [0], [1], [0, 0, 1, 1], [], []>} : vector<8x128xbf16>, vector<128x32xbf16>, vector<8x32xf32> -> vector<8x32xf32>
    %c0_76 = arith.constant 0 : index
    %c0_77 = arith.constant 0 : index
    %183 = vector.load %arg12[%c0_76, %c0_77] : memref<1x32xf32, #tpu.memory_space<vmem>>, vector<1x32xf32>
    %184 = vector.shape_cast %183 : vector<1x32xf32> to vector<32xf32>
    %185 = vector.shape_cast %184 : vector<32xf32> to vector<1x32xf32>
    %186 = vector.broadcast %185 : vector<1x32xf32> to vector<8x32xf32>
    %187 = arith.addf %182, %186 : vector<8x32xf32>
    %188 = arith.addf %135, %187 : vector<8x32xf32>
    %c0_78 = arith.constant 0 : index
    %c0_79 = arith.constant 0 : index
    %c0_80 = arith.constant 0 : index
    %189 = vector.load %arg13[%c0_78, %c0_79, %c0_80] : memref<1x8x32xf32, #tpu.memory_space<vmem>>, vector<1x8x32xf32>
    %190 = vector.shape_cast %189 : vector<1x8x32xf32> to vector<8x32xf32>
    %191 = vector.shape_cast %188 : vector<8x32xf32> to vector<1x8x32xf32>
    tpu.vector_store %arg13[%c0_78, %c0_79, %c0_80], %191 {strides = array<i32>} : memref<1x8x32xf32, #tpu.memory_space<vmem>>, vector<1x8x32xf32>,
    return
  }
  func.func @transform_0(%arg0: i32) -> (i32, i32, i32) {
    %c0_i32 = arith.constant 0 : i32
    %c0_i32_0 = arith.constant 0 : i32
    %c0_i32_1 = arith.constant 0 : i32
    return %arg0, %c0_i32, %c0_i32_0 : i32, i32, i32
  }
  func.func @transform_1(%arg0: i32) -> (i32, i32) {
    %c0_i32 = arith.constant 0 : i32
    %c0_i32_0 = arith.constant 0 : i32
    %c0_i32_1 = arith.constant 0 : i32
    return %c0_i32, %c0_i32_0 : i32, i32
  }
  func.func @transform_2(%arg0: i32) -> (i32, i32) {
    %c0_i32 = arith.constant 0 : i32
    %c0_i32_0 = arith.constant 0 : i32
    %c0_i32_1 = arith.constant 0 : i32
    return %c0_i32, %c0_i32_0 : i32, i32
  }
  func.func @transform_3(%arg0: i32) -> (i32, i32) {
    %c0_i32 = arith.constant 0 : i32
    %c0_i32_0 = arith.constant 0 : i32
    %c0_i32_1 = arith.constant 0 : i32
    return %c0_i32, %c0_i32_0 : i32, i32
  }
  func.func @transform_4(%arg0: i32) -> (i32, i32) {
    %c0_i32 = arith.constant 0 : i32
    %c0_i32_0 = arith.constant 0 : i32
    %c0_i32_1 = arith.constant 0 : i32
    return %c0_i32, %c0_i32_0 : i32, i32
  }
  func.func @transform_5(%arg0: i32) -> (i32, i32) {
    %c0_i32 = arith.constant 0 : i32
    %c0_i32_0 = arith.constant 0 : i32
    %c0_i32_1 = arith.constant 0 : i32
    return %c0_i32, %c0_i32_0 : i32, i32
  }
  func.func @transform_6(%arg0: i32) -> (i32, i32) {
    %c0_i32 = arith.constant 0 : i32
    %c0_i32_0 = arith.constant 0 : i32
    %c0_i32_1 = arith.constant 0 : i32
    return %c0_i32, %c0_i32_0 : i32, i32
  }
  func.func @transform_7(%arg0: i32) -> (i32, i32) {
    %c0_i32 = arith.constant 0 : i32
    %c0_i32_0 = arith.constant 0 : i32
    %c0_i32_1 = arith.constant 0 : i32
    return %c0_i32, %c0_i32_0 : i32, i32
  }
  func.func @transform_8(%arg0: i32) -> (i32, i32) {
    %c0_i32 = arith.constant 0 : i32
    %c0_i32_0 = arith.constant 0 : i32
    %c0_i32_1 = arith.constant 0 : i32
    return %c0_i32, %c0_i32_0 : i32, i32
  }
  func.func @transform_9(%arg0: i32) -> (i32, i32) {
    %c0_i32 = arith.constant 0 : i32
    %c0_i32_0 = arith.constant 0 : i32
    %c0_i32_1 = arith.constant 0 : i32
    return %c0_i32, %c0_i32_0 : i32, i32
  }
  func.func @transform_10(%arg0: i32) -> (i32, i32) {
    %c0_i32 = arith.constant 0 : i32
    %c0_i32_0 = arith.constant 0 : i32
    %c0_i32_1 = arith.constant 0 : i32
    return %c0_i32, %c0_i32_0 : i32, i32
  }
  func.func @transform_11(%arg0: i32) -> (i32, i32) {
    %c0_i32 = arith.constant 0 : i32
    %c0_i32_0 = arith.constant 0 : i32
    %c0_i32_1 = arith.constant 0 : i32
    return %c0_i32, %c0_i32_0 : i32, i32
  }
  func.func @transform_12(%arg0: i32) -> (i32, i32, i32) {
    %c0_i32 = arith.constant 0 : i32
    %c0_i32_0 = arith.constant 0 : i32
    %c0_i32_1 = arith.constant 0 : i32
    return %arg0, %c0_i32, %c0_i32_0 : i32, i32, i32
  }
  func.func @transform_13(%arg0: i32) -> (i32, i32, i32, i32) {
    %c0_i32 = arith.constant 0 : i32
    %c0_i32_0 = arith.constant 0 : i32
    %c0_i32_1 = arith.constant 0 : i32
    %c0_i32_2 = arith.constant 0 : i32
    return %arg0, %c0_i32, %c0_i32_0, %c0_i32_1 : i32, i32, i32, i32
  }
}

</mosaic_0001>

<llo_original>
// kernel: tpu_custom_call.1
$region0: #{tpu_custom_call.1}
  #allocation0 [shape = 'u32[]', space=smem, size = 0x4, offset = 0x4, fixed_abs, tag = 'smem constant byte address 0x4 - core index']
  #allocation1 [shape = 'u32[144,128]{1,0:T(1,128)}', space=vmem, size = 0x12000, scoped, tag = 'internal scratch']
  #allocation2 [shape = 'bf16[8,32]{1,0:T(8,128)(2,1)}', space=vmem, size = 0x800, scoped, tag = 'scratch operand']
  %s0 = inlined_call_operand.hbm [shape: f32[2,8,32], index: 0, kind: input, shape index: {}]
  %s1 = inlined_call_operand.hbm [shape: f32[1,32], index: 1, kind: input, shape index: {}]
  %s2 = inlined_call_operand.hbm [shape: f32[1,32], index: 2, kind: input, shape index: {}]
  %s3 = inlined_call_operand.hbm [shape: bf16[32,96], index: 3, kind: input, shape index: {}]
  %s4 = inlined_call_operand.hbm [shape: bf16[32,32], index: 4, kind: input, shape index: {}]
  %s5 = inlined_call_operand.hbm [shape: f32[1,32], index: 5, kind: input, shape index: {}]
  %s6 = inlined_call_operand.hbm [shape: f32[1,32], index: 6, kind: input, shape index: {}]
  %s7 = inlined_call_operand.hbm [shape: f32[1,32], index: 7, kind: input, shape index: {}]
  %s8 = inlined_call_operand.hbm [shape: bf16[32,128], index: 8, kind: input, shape index: {}]
  %s9 = inlined_call_operand.hbm [shape: f32[1,128], index: 9, kind: input, shape index: {}]
  %s10 = inlined_call_operand.hbm [shape: bf16[128,32], index: 10, kind: input, shape index: {}]
  %s11 = inlined_call_operand.hbm [shape: f32[1,32], index: 11, kind: input, shape index: {}]
  %s12 = inlined_call_operand.hbm [shape: f32[2,8,32], index: 12, kind: output, shape index: {0}]
  %s13 = inlined_call_operand.hbm [shape: bf16[2,4,8,8], index: 13, kind: output, shape index: {1}]
  %14 = xla_tuple %s12, %s13
  %s15 = sld [smem:[#allocation0]]
  $region137: #{tpu_custom_call.1} parent=0
    _
  %s17 = ssub.s32 1, %s15
  %s18 = scalar_select 0, %s17, %s15
  $region1: #{tpu_custom_call.1} parent=0
    #allocation3 [shape = 'u8[8192]{0}', space=vmem, size = 0x2000, scoped, tag = 'input window, operand 0']
    #allocation4 [shape = 's32[2]{0}', space=sflag, size = 0x8, scoped, tag = 'scoped memory for tpu_custom_call.1']
    #allocation5 [shape = 's32[2]{0}', space=sflag, size = 0x8, scoped, tag = 'scoped memory for tpu_custom_call.1']
    #allocation6 [shape = 'u8[512]{0}', space=vmem, size = 0x400, scoped, tag = 'input window, operand 1, single buffered']
    #allocation7 [shape = 's32[1]{0}', space=sflag, size = 0x4, scoped, tag = 'scoped memory for tpu_custom_call.1']
    #allocation8 [shape = 'u8[512]{0}', space=vmem, size = 0x400, scoped, tag = 'input window, operand 2, single buffered']
    #allocation9 [shape = 'u8[8192]{0}', space=vmem, size = 0x2000, scoped, tag = 'input window, operand 3, single buffered']
    #allocation10 [shape = 's32[1]{0}', space=sflag, size = 0x4, scoped, tag = 'scoped memory for tpu_custom_call.1']
    #allocation11 [shape = 'u8[8192]{0}', space=vmem, size = 0x2000, scoped, tag = 'input window, operand 4, single buffered']
    #allocation12 [shape = 'u8[512]{0}', space=vmem, size = 0x400, scoped, tag = 'input window, operand 5, single buffered']
    #allocation13 [shape = 's32[1]{0}', space=sflag, size = 0x4, scoped, tag = 'scoped memory for tpu_custom_call.1']
    #allocation14 [shape = 'u8[512]{0}', space=vmem, size = 0x400, scoped, tag = 'input window, operand 6, single buffered']
    #allocation15 [shape = 'u8[512]{0}', space=vmem, size = 0x400, scoped, tag = 'input window, operand 7, single buffered']
    #allocation16 [shape = 's32[1]{0}', space=sflag, size = 0x4, scoped, tag = 'scoped memory for tpu_custom_call.1']
    #allocation17 [shape = 'u8[8192]{0}', space=vmem, size = 0x2000, scoped, tag = 'input window, operand 8, single buffered']
    #allocation18 [shape = 'u8[512]{0}', space=vmem, size = 0x400, scoped, tag = 'input window, operand 9, single buffered']
    #allocation19 [shape = 's32[1]{0}', space=sflag, size = 0x4, scoped, tag = 'scoped memory for tpu_custom_call.1']
    #allocation20 [shape = 'u8[32768]{0}', space=vmem, size = 0x8000, scoped, tag = 'input window, operand 10, single buffered']
    #allocation21 [shape = 'u8[512]{0}', space=vmem, size = 0x400, scoped, tag = 'input window, operand 11, single buffered']
    #allocation22 [shape = 's32[1]{0}', space=sflag, size = 0x4, scoped, tag = 'scoped memory for tpu_custom_call.1']
    #allocation23 [shape = 'u8[8192]{0}', space=vmem, size = 0x2000, scoped, tag = 'output window, operand 0']
    #allocation24 [shape = 'u8[16384]{0}', space=vmem, size = 0x4000, scoped, tag = 'output window, operand 1']
    #allocation25 [shape = 's32[2]{0}', space=sflag, size = 0x8, scoped, tag = 'scoped memory for tpu_custom_call.1']
    %19 = vsyncpa [#allocation4], 0
    %s20 = scalar_lea.sflag [#allocation4], 1
    %21 = vsyncpa %s20, 0
    %22 = vsyncpa [#allocation7], 0
    %23 = vsyncpa [#allocation10], 0
    %24 = vsyncpa [#allocation13], 0
    %25 = vsyncpa [#allocation16], 0
    %26 = vsyncpa [#allocation19], 0
    %27 = vsyncpa [#allocation22], 0
    %28 = vsyncpa [#allocation5], 0
    %s29 = scalar_lea.sflag [#allocation5], 1
    %30 = vsyncpa %s29, 0
    %31 = vsyncpa [#allocation25], 0
    %s32 = scalar_lea.sflag [#allocation25], 1
    %33 = vsyncpa %s32, 0
    loop: start=0, step=1, limit=4
    $region2: #{tpu_custom_call.1} parent=1 // loop_pre_header
      _
    $region3: #{tpu_custom_call.1} parent=1 // loop_header
      %s35 = sphi 0, %s39
      %p36 = scmp.ge.s32.totalorder %s35, 4
      %s45 = sphi 0, %s47
      %s48 = sphi 0, %s45
      %s49 = sphi 0, %s48
      %s65 = sphi 0, %s49
      %s69 = sphi 0, %s69
      %s71 = sphi 0, %s69
      %s72 = sphi 0, %s71
      %s86 = sphi 0, %s72
      %s90 = sphi 0, %s90
      %s92 = sphi 0, %s90
      %s93 = sphi 0, %s92
      %s107 = sphi 0, %s93
      %s111 = sphi 0, %s111
      %s113 = sphi 0, %s111
      %s114 = sphi 0, %s113
      %s128 = sphi 0, %s114
      %s132 = sphi 0, %s132
      %s134 = sphi 0, %s132
      %s135 = sphi 0, %s134
      %s149 = sphi 0, %s135
      %s153 = sphi 0, %s153
      %s155 = sphi 0, %s153
      %s156 = sphi 0, %s155
      %s170 = sphi 0, %s156
      %s174 = sphi 0, %s174
      %s176 = sphi 0, %s174
      %s177 = sphi 0, %s176
      %s191 = sphi 0, %s177
      %s195 = sphi 0, %s195
      %s197 = sphi 0, %s195
      %s198 = sphi 0, %s197
      %s212 = sphi 0, %s198
      %s216 = sphi 0, %s216
      %s218 = sphi 0, %s216
      %s219 = sphi 0, %s218
      %s233 = sphi 0, %s219
      %s237 = sphi 0, %s237
      %s239 = sphi 0, %s237
      %s240 = sphi 0, %s239
      %s254 = sphi 0, %s240
      %s258 = sphi 0, %s258
      %s260 = sphi 0, %s258
      %s261 = sphi 0, %s260
      %s275 = sphi 0, %s261
      %s279 = sphi 0, %s279
      %s281 = sphi 0, %s279
      %s282 = sphi 0, %s281
      %s296 = sphi 0, %s282
      %s302 = sphi 0, %s304
      %s305 = sphi 0, %s302
      %s306 = sphi 0, %s305
      %s322 = sphi 0, %s306
      %s328 = sphi 0, %s330
      %s331 = sphi 0, %s328
      %s332 = sphi 0, %s331
      %s348 = sphi 0, %s332
    $region4: #{tpu_custom_call.1} parent=1 // loop_header_branch
      %38 = sbr.rel (%p36) target = $region8
    $region5: #{tpu_custom_call.1} parent=1 // loop_body
      %s40 = ssub.s32 %s35, 1
      %s41 = ssub.s32 %s35, 2
      %s42 = sadd.s32 %s35, 1
      %s43 = ssub.s32 %s35, %s42
      %p44 = scmp.eq.s32.totalorder %s43, 0
      %s46 = sadd.s32 %s45, 1
      %s47 = scalar_select %p44, %s45, %s46
      %p50 = pneg %p44
      %p51 = scmp.eq.s32.totalorder %s35, 1
      %p52 = por %p50, %p51
      %p53 = scmp.ne.s32.totalorder %s45, %s48
      %p54 = scmp.eq.s32.totalorder %s35, 0
      %p55 = por %p53, %p54
      %p56 = scmp.ne.s32.totalorder %s45, %s48
      %p57 = scmp.eq.s32.totalorder %s40, 1
      %p58 = por %p56, %p57
      %p59 = scmp.ne.s32.totalorder %s48, %s49
      %p60 = scmp.eq.s32.totalorder %s40, 0
      %p61 = por %p59, %p60
      %p62 = scmp.ne.s32.totalorder %s48, %s49
      %p63 = scmp.eq.s32.totalorder %s41, 1
      %p64 = por %p62, %p63
      %p66 = scmp.ne.s32.totalorder %s49, %s65
      %p67 = scmp.eq.s32.totalorder %s41, 0
      %p68 = por %p66, %p67
      %s70 = sadd.s32 %s69, 1
      %p73 = scmp.eq.s32.totalorder %s35, 1
      %p74 = scmp.ne.s32.totalorder %s69, %s71
      %p75 = scmp.eq.s32.totalorder %s35, 0
      %p76 = por %p74, %p75
      %p77 = scmp.ne.s32.totalorder %s69, %s71
      %p78 = scmp.eq.s32.totalorder %s40, 1
      %p79 = por %p77, %p78
      %p80 = scmp.ne.s32.totalorder %s71, %s72
      %p81 = scmp.eq.s32.totalorder %s40, 0
      %p82 = por %p80, %p81
      %p83 = scmp.ne.s32.totalorder %s71, %s72
      %p84 = scmp.eq.s32.totalorder %s41, 1
      %p85 = por %p83, %p84
      %p87 = scmp.ne.s32.totalorder %s72, %s86
      %p88 = scmp.eq.s32.totalorder %s41, 0
      %p89 = por %p87, %p88
      %s91 = sadd.s32 %s90, 1
      %p94 = scmp.eq.s32.totalorder %s35, 1
      %p95 = scmp.ne.s32.totalorder %s90, %s92
      %p96 = scmp.eq.s32.totalorder %s35, 0
      %p97 = por %p95, %p96
      %p98 = scmp.ne.s32.totalorder %s90, %s92
      %p99 = scmp.eq.s32.totalorder %s40, 1
      %p100 = por %p98, %p99
      %p101 = scmp.ne.s32.totalorder %s92, %s93
      %p102 = scmp.eq.s32.totalorder %s40, 0
      %p103 = por %p101, %p102
      %p104 = scmp.ne.s32.totalorder %s92, %s93
      %p105 = scmp.eq.s32.totalorder %s41, 1
      %p106 = por %p104, %p105
      %p108 = scmp.ne.s32.totalorder %s93, %s107
      %p109 = scmp.eq.s32.totalorder %s41, 0
      %p110 = por %p108, %p109
      %s112 = sadd.s32 %s111, 1
      %p115 = scmp.eq.s32.totalorder %s35, 1
      %p116 = scmp.ne.s32.totalorder %s111, %s113
      %p117 = scmp.eq.s32.totalorder %s35, 0
      %p118 = por %p116, %p117
      %p119 = scmp.ne.s32.totalorder %s111, %s113
      %p120 = scmp.eq.s32.totalorder %s40, 1
      %p121 = por %p119, %p120
      %p122 = scmp.ne.s32.totalorder %s113, %s114
      %p123 = scmp.eq.s32.totalorder %s40, 0
      %p124 = por %p122, %p123
      %p125 = scmp.ne.s32.totalorder %s113, %s114
      %p126 = scmp.eq.s32.totalorder %s41, 1
      %p127 = por %p125, %p126
      %p129 = scmp.ne.s32.totalorder %s114, %s128
      %p130 = scmp.eq.s32.totalorder %s41, 0
      %p131 = por %p129, %p130
      %s133 = sadd.s32 %s132, 1
      %p136 = scmp.eq.s32.totalorder %s35, 1
      %p137 = scmp.ne.s32.totalorder %s132, %s134
      %p138 = scmp.eq.s32.totalorder %s35, 0
      %p139 = por %p137, %p138
      %p140 = scmp.ne.s32.totalorder %s132, %s134
      %p141 = scmp.eq.s32.totalorder %s40, 1
      %p142 = por %p140, %p141
      %p143 = scmp.ne.s32.totalorder %s134, %s135
      %p144 = scmp.eq.s32.totalorder %s40, 0
      %p145 = por %p143, %p144
      %p146 = scmp.ne.s32.totalorder %s134, %s135
      %p147 = scmp.eq.s32.totalorder %s41, 1
      %p148 = por %p146, %p147
      %p150 = scmp.ne.s32.totalorder %s135, %s149
      %p151 = scmp.eq.s32.totalorder %s41, 0
      %p152 = por %p150, %p151
      %s154 = sadd.s32 %s153, 1
      %p157 = scmp.eq.s32.totalorder %s35, 1
      %p158 = scmp.ne.s32.totalorder %s153, %s155
      %p159 = scmp.eq.s32.totalorder %s35, 0
      %p160 = por %p158, %p159
      %p161 = scmp.ne.s32.totalorder %s153, %s155
      %p162 = scmp.eq.s32.totalorder %s40, 1
      %p163 = por %p161, %p162
      %p164 = scmp.ne.s32.totalorder %s155, %s156
      %p165 = scmp.eq.s32.totalorder %s40, 0
      %p166 = por %p164, %p165
      %p167 = scmp.ne.s32.totalorder %s155, %s156
      %p168 = scmp.eq.s32.totalorder %s41, 1
      %p169 = por %p167, %p168
      %p171 = scmp.ne.s32.totalorder %s156, %s170
      %p172 = scmp.eq.s32.totalorder %s41, 0
      %p173 = por %p171, %p172
      %s175 = sadd.s32 %s174, 1
      %p178 = scmp.eq.s32.totalorder %s35, 1
      %p179 = scmp.ne.s32.totalorder %s174, %s176
      %p180 = scmp.eq.s32.totalorder %s35, 0
      %p181 = por %p179, %p180
      %p182 = scmp.ne.s32.totalorder %s174, %s176
      %p183 = scmp.eq.s32.totalorder %s40, 1
      %p184 = por %p182, %p183
      %p185 = scmp.ne.s32.totalorder %s176, %s177
      %p186 = scmp.eq.s32.totalorder %s40, 0
      %p187 = por %p185, %p186
      %p188 = scmp.ne.s32.totalorder %s176, %s177
      %p189 = scmp.eq.s32.totalorder %s41, 1
      %p190 = por %p188, %p189
      %p192 = scmp.ne.s32.totalorder %s177, %s191
      %p193 = scmp.eq.s32.totalorder %s41, 0
      %p194 = por %p192, %p193
      %s196 = sadd.s32 %s195, 1
      %p199 = scmp.eq.s32.totalorder %s35, 1
      %p200 = scmp.ne.s32.totalorder %s195, %s197
      %p201 = scmp.eq.s32.totalorder %s35, 0
      %p202 = por %p200, %p201
      %p203 = scmp.ne.s32.totalorder %s195, %s197
      %p204 = scmp.eq.s32.totalorder %s40, 1
      %p205 = por %p203, %p204
      %p206 = scmp.ne.s32.totalorder %s197, %s198
      %p207 = scmp.eq.s32.totalorder %s40, 0
      %p208 = por %p206, %p207
      %p209 = scmp.ne.s32.totalorder %s197, %s198
      %p210 = scmp.eq.s32.totalorder %s41, 1
      %p211 = por %p209, %p210
      %p213 = scmp.ne.s32.totalorder %s198, %s212
      %p214 = scmp.eq.s32.totalorder %s41, 0
      %p215 = por %p213, %p214
      %s217 = sadd.s32 %s216, 1
      %p220 = scmp.eq.s32.totalorder %s35, 1
      %p221 = scmp.ne.s32.totalorder %s216, %s218
      %p222 = scmp.eq.s32.totalorder %s35, 0
      %p223 = por %p221, %p222
      %p224 = scmp.ne.s32.totalorder %s216, %s218
      %p225 = scmp.eq.s32.totalorder %s40, 1
      %p226 = por %p224, %p225
      %p227 = scmp.ne.s32.totalorder %s218, %s219
      %p228 = scmp.eq.s32.totalorder %s40, 0
      %p229 = por %p227, %p228
      %p230 = scmp.ne.s32.totalorder %s218, %s219
      %p231 = scmp.eq.s32.totalorder %s41, 1
      %p232 = por %p230, %p231
      %p234 = scmp.ne.s32.totalorder %s219, %s233
      %p235 = scmp.eq.s32.totalorder %s41, 0
      %p236 = por %p234, %p235
      %s238 = sadd.s32 %s237, 1
      %p241 = scmp.eq.s32.totalorder %s35, 1
      %p242 = scmp.ne.s32.totalorder %s237, %s239
      %p243 = scmp.eq.s32.totalorder %s35, 0
      %p244 = por %p242, %p243
      %p245 = scmp.ne.s32.totalorder %s237, %s239
      %p246 = scmp.eq.s32.totalorder %s40, 1
      %p247 = por %p245, %p246
      %p248 = scmp.ne.s32.totalorder %s239, %s240
      %p249 = scmp.eq.s32.totalorder %s40, 0
      %p250 = por %p248, %p249
      %p251 = scmp.ne.s32.totalorder %s239, %s240
      %p252 = scmp.eq.s32.totalorder %s41, 1
      %p253 = por %p251, %p252
      %p255 = scmp.ne.s32.totalorder %s240, %s254
      %p256 = scmp.eq.s32.totalorder %s41, 0
      %p257 = por %p255, %p256
      %s259 = sadd.s32 %s258, 1
      %p262 = scmp.eq.s32.totalorder %s35, 1
      %p263 = scmp.ne.s32.totalorder %s258, %s260
      %p264 = scmp.eq.s32.totalorder %s35, 0
      %p265 = por %p263, %p264
      %p266 = scmp.ne.s32.totalorder %s258, %s260
      %p267 = scmp.eq.s32.totalorder %s40, 1
      %p268 = por %p266, %p267
      %p269 = scmp.ne.s32.totalorder %s260, %s261
      %p270 = scmp.eq.s32.totalorder %s40, 0
      %p271 = por %p269, %p270
      %p272 = scmp.ne.s32.totalorder %s260, %s261
      %p273 = scmp.eq.s32.totalorder %s41, 1
      %p274 = por %p272, %p273
      %p276 = scmp.ne.s32.totalorder %s261, %s275
      %p277 = scmp.eq.s32.totalorder %s41, 0
      %p278 = por %p276, %p277
      %s280 = sadd.s32 %s279, 1
      %p283 = scmp.eq.s32.totalorder %s35, 1
      %p284 = scmp.ne.s32.totalorder %s279, %s281
      %p285 = scmp.eq.s32.totalorder %s35, 0
      %p286 = por %p284, %p285
      %p287 = scmp.ne.s32.totalorder %s279, %s281
      %p288 = scmp.eq.s32.totalorder %s40, 1
      %p289 = por %p287, %p288
      %p290 = scmp.ne.s32.totalorder %s281, %s282
      %p291 = scmp.eq.s32.totalorder %s40, 0
      %p292 = por %p290, %p291
      %p293 = scmp.ne.s32.totalorder %s281, %s282
      %p294 = scmp.eq.s32.totalorder %s41, 1
      %p295 = por %p293, %p294
      %p297 = scmp.ne.s32.totalorder %s282, %s296
      %p298 = scmp.eq.s32.totalorder %s41, 0
      %p299 = por %p297, %p298
      %s300 = ssub.s32 %s35, %s42
      %p301 = scmp.eq.s32.totalorder %s300, 0
      %s303 = sadd.s32 %s302, 1
      %s304 = scalar_select %p301, %s302, %s303
      %p307 = pneg %p301
      %p308 = scmp.eq.s32.totalorder %s35, 1
      %p309 = por %p307, %p308
      %p310 = scmp.ne.s32.totalorder %s302, %s305
      %p311 = scmp.eq.s32.totalorder %s35, 0
      %p312 = por %p310, %p311
      %p313 = scmp.ne.s32.totalorder %s302, %s305
      %p314 = scmp.eq.s32.totalorder %s40, 1
      %p315 = por %p313, %p314
      %p316 = scmp.ne.s32.totalorder %s305, %s306
      %p317 = scmp.eq.s32.totalorder %s40, 0
      %p318 = por %p316, %p317
      %p319 = scmp.ne.s32.totalorder %s305, %s306
      %p320 = scmp.eq.s32.totalorder %s41, 1
      %p321 = por %p319, %p320
      %p323 = scmp.ne.s32.totalorder %s306, %s322
      %p324 = scmp.eq.s32.totalorder %s41, 0
      %p325 = por %p323, %p324
      %s326 = ssub.s32 %s35, %s42
      %p327 = scmp.eq.s32.totalorder %s326, 0
      %s329 = sadd.s32 %s328, 1
      %s330 = scalar_select %p327, %s328, %s329
      %p333 = pneg %p327
      %p334 = scmp.eq.s32.totalorder %s35, 1
      %p335 = por %p333, %p334
      %p336 = scmp.ne.s32.totalorder %s328, %s331
      %p337 = scmp.eq.s32.totalorder %s35, 0
      %p338 = por %p336, %p337
      %p339 = scmp.ne.s32.totalorder %s328, %s331
      %p340 = scmp.eq.s32.totalorder %s40, 1
      %p341 = por %p339, %p340
      %p342 = scmp.ne.s32.totalorder %s331, %s332
      %p343 = scmp.eq.s32.totalorder %s40, 0
      %p344 = por %p342, %p343
      %p345 = scmp.ne.s32.totalorder %s331, %s332
      %p346 = scmp.eq.s32.totalorder %s41, 1
      %p347 = por %p345, %p346
      %p349 = scmp.ne.s32.totalorder %s332, %s348
      %p350 = scmp.eq.s32.totalorder %s41, 0
      %p351 = por %p349, %p350
      %p352 = scmp.le.s32.totalorder 1, %s35
      %p353 = scmp.lt.s32.totalorder %s35, 3
      %p354 = pnand %p352, %p353
      %p355 = pneg %p354
      // Predicated region
      $region9: #{tpu_custom_call.1} parent=5 // pred_check
        _
      $region10: #{tpu_custom_call.1} parent=5 // pred_check_branch
        %357 = sbr.rel (%p354) target = $region12
      $region11: #{tpu_custom_call.1} parent=5 // pred_region
        %s358 = ssub.s32 %s35, 1
        // Predicated region
        $region13: #{tpu_custom_call.1} parent=11 // pred_check
          %p359 = pneg %p82
        $region14: #{tpu_custom_call.1} parent=11 // pred_check_branch
          %361 = sbr.rel (%p359) target = $region16
        $region15: #{tpu_custom_call.1} parent=11 // pred_region
          %s363 = ssub.s32 16, 16
          %364 = vsyncadd [#allocation7], %s363
          %s366 = sshll.u32 [#allocation6], 4
          %s367 = int_to_ptr.vmem [resolvable:$true] %s366
          %369 = dma.hbm_to_vmem [thread:$0]  %s1, 16, %s367, [#allocation7]
        $region16: #{tpu_custom_call.1} parent=11 // pred_fallthru
          _
        // Predicated region
        $region17: #{tpu_custom_call.1} parent=11 // pred_check
          %p370 = pneg %p103
        $region18: #{tpu_custom_call.1} parent=11 // pred_check_branch
          %372 = sbr.rel (%p370) target = $region20
        $region19: #{tpu_custom_call.1} parent=11 // pred_region
          %s374 = ssub.s32 16, 16
          %375 = vsyncadd [#allocation7], %s374
          %s377 = sshll.u32 [#allocation8], 4
          %s378 = int_to_ptr.vmem [resolvable:$true] %s377
          %380 = dma.hbm_to_vmem [thread:$0]  %s2, 16, %s378, [#allocation7]
        $region20: #{tpu_custom_call.1} parent=11 // pred_fallthru
          _
        // Predicated region
        $region21: #{tpu_custom_call.1} parent=11 // pred_check
          %p381 = pneg %p124
        $region22: #{tpu_custom_call.1} parent=11 // pred_check_branch
          %383 = sbr.rel (%p381) target = $region24
        $region23: #{tpu_custom_call.1} parent=11 // pred_region
          %s385 = ssub.s32 256, 256
          %386 = vsyncadd [#allocation10], %s385
          %s387 = sshll.u32 [#allocation9], 4
          %s388 = int_to_ptr.vmem [resolvable:$true] %s387
          %393 = dma.hbm_to_vmem [thread:$0]  %s3, 256, %s388, [#allocation10], 64, 64, 4
        $region24: #{tpu_custom_call.1} parent=11 // pred_fallthru
          _
        // Predicated region
        $region25: #{tpu_custom_call.1} parent=11 // pred_check
          %p394 = pneg %p145
        $region26: #{tpu_custom_call.1} parent=11 // pred_check_branch
          %396 = sbr.rel (%p394) target = $region28
        $region27: #{tpu_custom_call.1} parent=11 // pred_region
          %s398 = ssub.s32 256, 256
          %399 = vsyncadd [#allocation10], %s398
          %s400 = sshll.u32 [#allocation11], 4
          %s401 = int_to_ptr.vmem [resolvable:$true] %s400
          %406 = dma.hbm_to_vmem [thread:$0]  %s4, 256, %s401, [#allocation10], 64, 64, 4
        $region28: #{tpu_custom_call.1} parent=11 // pred_fallthru
          _
        // Predicated region
        $region29: #{tpu_custom_call.1} parent=11 // pred_check
          %p407 = pneg %p166
        $region30: #{tpu_custom_call.1} parent=11 // pred_check_branch
          %409 = sbr.rel (%p407) target = $region32
        $region31: #{tpu_custom_call.1} parent=11 // pred_region
          %s411 = ssub.s32 16, 16
          %412 = vsyncadd [#allocation13], %s411
          %s414 = sshll.u32 [#allocation12], 4
          %s415 = int_to_ptr.vmem [resolvable:$true] %s414
          %417 = dma.hbm_to_vmem [thread:$0]  %s5, 16, %s415, [#allocation13]
        $region32: #{tpu_custom_call.1} parent=11 // pred_fallthru
          _
        // Predicated region
        $region33: #{tpu_custom_call.1} parent=11 // pred_check
          %p418 = pneg %p187
        $region34: #{tpu_custom_call.1} parent=11 // pred_check_branch
          %420 = sbr.rel (%p418) target = $region36
        $region35: #{tpu_custom_call.1} parent=11 // pred_region
          %s422 = ssub.s32 16, 16
          %423 = vsyncadd [#allocation13], %s422
          %s425 = sshll.u32 [#allocation14], 4
          %s426 = int_to_ptr.vmem [resolvable:$true] %s425
          %428 = dma.hbm_to_vmem [thread:$0]  %s6, 16, %s426, [#allocation13]
        $region36: #{tpu_custom_call.1} parent=11 // pred_fallthru
          _
        // Predicated region
        $region37: #{tpu_custom_call.1} parent=11 // pred_check
          %p429 = pneg %p208
        $region38: #{tpu_custom_call.1} parent=11 // pred_check_branch
          %431 = sbr.rel (%p429) target = $region40
        $region39: #{tpu_custom_call.1} parent=11 // pred_region
          %s433 = ssub.s32 16, 16
          %434 = vsyncadd [#allocation16], %s433
          %s436 = sshll.u32 [#allocation15], 4
          %s437 = int_to_ptr.vmem [resolvable:$true] %s436
          %439 = dma.hbm_to_vmem [thread:$0]  %s7, 16, %s437, [#allocation16]
        $region40: #{tpu_custom_call.1} parent=11 // pred_fallthru
          _
        // Predicated region
        $region41: #{tpu_custom_call.1} parent=11 // pred_check
          %p440 = pneg %p229
        $region42: #{tpu_custom_call.1} parent=11 // pred_check_branch
          %442 = sbr.rel (%p440) target = $region44
        $region43: #{tpu_custom_call.1} parent=11 // pred_region
          %s444 = ssub.s32 256, 256
          %445 = vsyncadd [#allocation16], %s444
          %s446 = sshll.u32 [#allocation17], 4
          %s447 = int_to_ptr.vmem [resolvable:$true] %s446
          %452 = dma.hbm_to_vmem [thread:$0]  %s8, 256, %s447, [#allocation16], 64, 64, 4
        $region44: #{tpu_custom_call.1} parent=11 // pred_fallthru
          _
        // Predicated region
        $region45: #{tpu_custom_call.1} parent=11 // pred_check
          %p453 = pneg %p250
        $region46: #{tpu_custom_call.1} parent=11 // pred_check_branch
          %455 = sbr.rel (%p453) target = $region48
        $region47: #{tpu_custom_call.1} parent=11 // pred_region
          %s457 = ssub.s32 16, 16
          %458 = vsyncadd [#allocation19], %s457
          %s460 = sshll.u32 [#allocation18], 4
          %s461 = int_to_ptr.vmem [resolvable:$true] %s460
          %463 = dma.hbm_to_vmem [thread:$0]  %s9, 16, %s461, [#allocation19]
        $region48: #{tpu_custom_call.1} parent=11 // pred_fallthru
          _
        // Predicated region
        $region49: #{tpu_custom_call.1} parent=11 // pred_check
          %p464 = pneg %p271
        $region50: #{tpu_custom_call.1} parent=11 // pred_check_branch
          %466 = sbr.rel (%p464) target = $region52
        $region51: #{tpu_custom_call.1} parent=11 // pred_region
          %s468 = ssub.s32 1024, 1024
          %469 = vsyncadd [#allocation19], %s468
          %s470 = sshll.u32 [#allocation20], 4
          %s471 = int_to_ptr.vmem [resolvable:$true] %s470
          %476 = dma.hbm_to_vmem [thread:$0]  %s10, 1024, %s471, [#allocation19], 64, 64, 4
        $region52: #{tpu_custom_call.1} parent=11 // pred_fallthru
          _
        // Predicated region
        $region53: #{tpu_custom_call.1} parent=11 // pred_check
          %p477 = pneg %p292
        $region54: #{tpu_custom_call.1} parent=11 // pred_check_branch
          %479 = sbr.rel (%p477) target = $region56
        $region55: #{tpu_custom_call.1} parent=11 // pred_region
          %s481 = ssub.s32 16, 16
          %482 = vsyncadd [#allocation22], %s481
          %s484 = sshll.u32 [#allocation21], 4
          %s485 = int_to_ptr.vmem [resolvable:$true] %s484
          %487 = dma.hbm_to_vmem [thread:$0]  %s11, 16, %s485, [#allocation22]
        $region56: #{tpu_custom_call.1} parent=11 // pred_fallthru
          _
      $region12: #{tpu_custom_call.1} parent=5 // pred_fallthru
        _
      %p488 = scmp.lt.s32.totalorder %s35, 2
      // Predicated region
      $region57: #{tpu_custom_call.1} parent=5 // pred_check
        %p489 = pneg %p488
      $region58: #{tpu_custom_call.1} parent=5 // pred_check_branch
        %491 = sbr.rel (%p489) target = $region60
      $region59: #{tpu_custom_call.1} parent=5 // pred_region
        // Predicated region
        $region61: #{tpu_custom_call.1} parent=59 // pred_check
          %p492 = pneg %p55
        $region62: #{tpu_custom_call.1} parent=59 // pred_check_branch
          %494 = sbr.rel (%p492) target = $region64
        $region63: #{tpu_custom_call.1} parent=59 // pred_region
          %s495 = sand.u32 %s45, 1
          %s496 = scalar_lea.sflag [#allocation4], %s495
          %s497 = sand.u32 %s45, 1
          %s498 = smul.addr %s497, 8
          %s499 = scalar_lea.vmem [#allocation3], %s498
          %s501 = ssub.s32 128, 128
          %502 = vsyncadd %s496, %s501
          %s503 = smul.addr %s35, 128
          %s504 = scalar_lea.hbm %s0, %s503
          %s506 = sshll.u32 %s499, 4
          %s507 = int_to_ptr.vmem [resolvable:$true] %s506
          %509 = dma.hbm_to_vmem [thread:$0]  %s504, 128, %s507, %s496
        $region64: #{tpu_custom_call.1} parent=59 // pred_fallthru
          _
      $region60: #{tpu_custom_call.1} parent=5 // pred_fallthru
        _
      %p510 = scmp.le.s32.totalorder 1, %s35
      %p511 = scmp.lt.s32.totalorder %s35, 3
      %p512 = pnand %p510, %p511
      %p513 = pneg %p512
      // Predicated region
      $region65: #{tpu_custom_call.1} parent=5 // pred_check
        _
      $region66: #{tpu_custom_call.1} parent=5 // pred_check_branch
        %515 = sbr.rel (%p512) target = $region68
      $region67: #{tpu_custom_call.1} parent=5 // pred_region
        %s516 = ssub.s32 %s35, 1
        %s517 = sand.u32 %s48, 1
        %s518 = scalar_lea.sflag [#allocation4], %s517
        %s519 = sand.u32 %s48, 1
        %s520 = smul.addr %s519, 8
        %s521 = scalar_lea.vmem [#allocation3], %s520
        // Predicated region
        $region69: #{tpu_custom_call.1} parent=67 // pred_check
          %p522 = pneg %p61
        $region70: #{tpu_custom_call.1} parent=67 // pred_check_branch
          %524 = sbr.rel (%p522) target = $region72
        $region71: #{tpu_custom_call.1} parent=67 // pred_region
          %525 = dma.done %s518, 128
        $region72: #{tpu_custom_call.1} parent=67 // pred_fallthru
          _
        // Predicated region
        $region73: #{tpu_custom_call.1} parent=67 // pred_check
          %p526 = pneg %p82
        $region74: #{tpu_custom_call.1} parent=67 // pred_check_branch
          %528 = sbr.rel (%p526) target = $region76
        $region75: #{tpu_custom_call.1} parent=67 // pred_region
          %529 = dma.done [#allocation7], 16
        $region76: #{tpu_custom_call.1} parent=67 // pred_fallthru
          _
        // Predicated region
        $region77: #{tpu_custom_call.1} parent=67 // pred_check
          %p530 = pneg %p103
        $region78: #{tpu_custom_call.1} parent=67 // pred_check_branch
          %532 = sbr.rel (%p530) target = $region80
        $region79: #{tpu_custom_call.1} parent=67 // pred_region
          %533 = dma.done [#allocation7], 16
        $region80: #{tpu_custom_call.1} parent=67 // pred_fallthru
          _
        // Predicated region
        $region81: #{tpu_custom_call.1} parent=67 // pred_check
          %p534 = pneg %p124
        $region82: #{tpu_custom_call.1} parent=67 // pred_check_branch
          %536 = sbr.rel (%p534) target = $region84
        $region83: #{tpu_custom_call.1} parent=67 // pred_region
          %537 = dma.done [#allocation10], 256
        $region84: #{tpu_custom_call.1} parent=67 // pred_fallthru
          _
        // Predicated region
        $region85: #{tpu_custom_call.1} parent=67 // pred_check
          %p538 = pneg %p145
        $region86: #{tpu_custom_call.1} parent=67 // pred_check_branch
          %540 = sbr.rel (%p538) target = $region88
        $region87: #{tpu_custom_call.1} parent=67 // pred_region
          %541 = dma.done [#allocation10], 256
        $region88: #{tpu_custom_call.1} parent=67 // pred_fallthru
          _
        // Predicated region
        $region89: #{tpu_custom_call.1} parent=67 // pred_check
          %p542 = pneg %p166
        $region90: #{tpu_custom_call.1} parent=67 // pred_check_branch
          %544 = sbr.rel (%p542) target = $region92
        $region91: #{tpu_custom_call.1} parent=67 // pred_region
          %545 = dma.done [#allocation13], 16
        $region92: #{tpu_custom_call.1} parent=67 // pred_fallthru
          _
        // Predicated region
        $region93: #{tpu_custom_call.1} parent=67 // pred_check
          %p546 = pneg %p187
        $region94: #{tpu_custom_call.1} parent=67 // pred_check_branch
          %548 = sbr.rel (%p546) target = $region96
        $region95: #{tpu_custom_call.1} parent=67 // pred_region
          %549 = dma.done [#allocation13], 16
        $region96: #{tpu_custom_call.1} parent=67 // pred_fallthru
          _
        // Predicated region
        $region97: #{tpu_custom_call.1} parent=67 // pred_check
          %p550 = pneg %p208
        $region98: #{tpu_custom_call.1} parent=67 // pred_check_branch
          %552 = sbr.rel (%p550) target = $region100
        $region99: #{tpu_custom_call.1} parent=67 // pred_region
          %553 = dma.done [#allocation16], 16
        $region100: #{tpu_custom_call.1} parent=67 // pred_fallthru
          _
        // Predicated region
        $region101: #{tpu_custom_call.1} parent=67 // pred_check
          %p554 = pneg %p229
        $region102: #{tpu_custom_call.1} parent=67 // pred_check_branch
          %556 = sbr.rel (%p554) target = $region104
        $region103: #{tpu_custom_call.1} parent=67 // pred_region
          %557 = dma.done [#allocation16], 256
        $region104: #{tpu_custom_call.1} parent=67 // pred_fallthru
          _
        // Predicated region
        $region105: #{tpu_custom_call.1} parent=67 // pred_check
          %p558 = pneg %p250
        $region106: #{tpu_custom_call.1} parent=67 // pred_check_branch
          %560 = sbr.rel (%p558) target = $region108
        $region107: #{tpu_custom_call.1} parent=67 // pred_region
          %561 = dma.done [#allocation19], 16
        $region108: #{tpu_custom_call.1} parent=67 // pred_fallthru
          _
        // Predicated region
        $region109: #{tpu_custom_call.1} parent=67 // pred_check
          %p562 = pneg %p271
        $region110: #{tpu_custom_call.1} parent=67 // pred_check_branch
          %564 = sbr.rel (%p562) target = $region112
        $region111: #{tpu_custom_call.1} parent=67 // pred_region
          %565 = dma.done [#allocation19], 1024
        $region112: #{tpu_custom_call.1} parent=67 // pred_fallthru
          _
        // Predicated region
        $region113: #{tpu_custom_call.1} parent=67 // pred_check
          %p566 = pneg %p292
        $region114: #{tpu_custom_call.1} parent=67 // pred_check_branch
          %568 = sbr.rel (%p566) target = $region116
        $region115: #{tpu_custom_call.1} parent=67 // pred_region
          %569 = dma.done [#allocation22], 16
        $region116: #{tpu_custom_call.1} parent=67 // pred_fallthru
          _
        %s570 = sand.u32 %s48, 1
        %s571 = scalar_lea.sflag [#allocation4], %s570
        %s572 = sand.u32 %s48, 1
        %s573 = smul.addr %s572, 8
        %s574 = scalar_lea.vmem [#allocation3], %s573
        %p575 = pneg %p61
        %p576 = pneg %p58
        %p577 = pneg %p82
        %p578 = pneg %p79
        %p579 = pneg %p103
        %p580 = pneg %p100
        %p581 = pneg %p124
        %p582 = pneg %p121
        %p583 = pneg %p145
        %p584 = pneg %p142
        %p585 = pneg %p166
        %p586 = pneg %p163
        %p587 = pneg %p187
        %p588 = pneg %p184
        %p589 = pneg %p208
        %p590 = pneg %p205
        %p591 = pneg %p229
        %p592 = pneg %p226
        %p593 = pneg %p250
        %p594 = pneg %p247
        %p595 = pneg %p271
        %p596 = pneg %p268
        %p597 = pneg %p292
        %p598 = pneg %p289
        %p599 = pneg %p318
        %p600 = pneg %p315
        %s601 = sand.u32 %s305, 1
        %s602 = scalar_lea.sflag [#allocation5], %s601
        %s603 = sand.u32 %s305, 1
        %s604 = smul.addr %s603, 8
        %s605 = scalar_lea.vmem [#allocation23], %s604
        %p606 = pneg %p344
        %p607 = pneg %p341
        %s608 = sand.u32 %s331, 1
        %s609 = scalar_lea.sflag [#allocation25], %s608
        %s610 = sand.u32 %s331, 1
        %s611 = smul.addr %s610, 16
        %s612 = scalar_lea.vmem [#allocation24], %s611
        %v614 = vld [vmem:[%s521] sm:$0xff]
        %v615 = vld [vmem:[#allocation6] sm:$0x1]
        %v616 = vld [vmem:[#allocation8] sm:$0x1]
        %vm617 = vcmask 261120
        %v618 = vsel %vm617, %v614, 0.0
        %619 = vadd.xlane.f32.xlu0 %v618
        %v620 = vpop.xlane.xlu0 %619
        %v621 = vrcp.pop 32.0
        %v622 = vmul.f32 %v620, %v621
        %v623 = vsub.f32 %v614, %v622
        %v624 = vmul.f32 %v623, %v623
        %v625 = vsel %vm617, %v624, 0.0
        %626 = vadd.xlane.f32.xlu0 %v625
        %v627 = vpop.xlane.xlu0 %626
        %v628 = vmul.f32 %v627, %v621
        %v629 = vadd.f32 %v628, 1e-05
        %v630 = vrsqrt.pop %v629
        %v631 = vmul.f32 %v623, %v630
        %v633 = vlaneseq
        %v634 = vshrl.u32 %v633, 7
        %v635 = vsub.s32 0, %v634
        %v636 = vrot.slane %v615, %v635
        %v638 = vmul.f32 %v631, %v636
        %v640 = vlaneseq
        %v641 = vshrl.u32 %v640, 7
        %v642 = vsub.s32 0, %v641
        %v643 = vrot.slane %v616, %v642
        %v645 = vadd.f32 %v638, %v643
        %v646 = vpack.c.bf16 %v645, %v645
        %v647 = vld [vmem:[#allocation9] sm:$0xf]
        %v648 = vld [vmem:[#allocation9 + $0x4] sm:$0xf]
        %v649 = vld [vmem:[#allocation9 + $0x8] sm:$0xf]
        %v650 = vld [vmem:[#allocation9 + $0xc] sm:$0xf]
        %v655 = vunpack.c.l.b16 %v647
        %v656 = vunpack.c.l.b16 %v648
        %v657 = vunpack.c.l.b16 %v649
        %v658 = vunpack.c.l.b16 %v650
        %v659 = vpack.c.b16 %v656, %v655
        %v660 = vpack.c.b16 %v658, %v657
        %v664 = vsel %vm617, %v646, 0
        %666 = vmatprep.subr.bf16.mxu0 0
        %667 = vmatpush1.bf16.msra.mxu0 %v659
        %668 = vmatprep.subr.bf16.mxu0 0
        %669 = vmatpush1.bf16.msra.mxu0 %v660
        %670 = vmatprep.subr.bf16.mxu0 0
        %671 = vmatpush1.bf16.msra.mxu0 0
        %672 = vmatprep.subr.bf16.mxu0 0
        %673 = vmatpush1.bf16.msra.mxu0 0
        %674 = vmatprep.subr.bf16.mxu0 0
        %675 = vmatpush1.bf16.msra.mxu0 0
        %676 = vmatprep.subr.bf16.mxu0 0
        %677 = vmatpush1.bf16.msra.mxu0 0
        %678 = vmatprep.subr.bf16.mxu0 0
        %679 = vmatpush1.bf16.msra.mxu0 0
        %680 = vmatprep.subr.bf16.mxu0 0
        %681 = vmatpush1.bf16.msra.mxu0 0
        %682 = vmatprep.subr.bf16.mxu0 0
        %683 = vmatpush1.bf16.msra.mxu0 0
        %684 = vmatprep.subr.bf16.mxu0 0
        %685 = vmatpush1.bf16.msra.mxu0 0
        %686 = vmatprep.subr.bf16.mxu0 0
        %687 = vmatpush1.bf16.msra.mxu0 0
        %688 = vmatprep.subr.bf16.mxu0 0
        %689 = vmatpush1.bf16.msra.mxu0 0
        %690 = vmatprep.subr.bf16.mxu0 0
        %691 = vmatpush1.bf16.msra.mxu0 0
        %692 = vmatprep.subr.bf16.mxu0 0
        %693 = vmatpush1.bf16.msra.mxu0 0
        %694 = vmatprep.subr.bf16.mxu0 0
        %695 = vmatpush1.bf16.msra.mxu0 0
        %696 = vmatprep.subr.bf16.mxu0 0
        %697 = vmatpush1.bf16.msra.mxu0 0
        %698 = vmatprep.mubr.bf16.mxu0 0
        %699 = vmatmul.mubr.bf16.gmra.mrb[0].mxu0 %v664
        %v700 = vpop.f32.mrb[0].mxu0
        %v701 = vadd.f32 0.0, %v700
        %v702 = vpop.f32.mrb[0].mxu0
        %v703 = vpop.f32.mrb[0].mxu0
        %v704 = vpop.f32.mrb[0].mxu0
        %705 = vdwg.mxu0
        %v706 = vmul.f32 %v701, 0.35355338
        %v707 = vpack.c.bf16 %v706, %v706
        %v708 = vpack.c.bf16 %v701, %v701
        %710 = vrot.lane.b32.xlu0 %v708, 96
        %v711 = vpop.permute.xlu0 %710
        %vm712 = vcmask 64512
        %v714 = vsel %vm712, %v707, 0
        %v717 = vsel %vm712, %v711, 0
        %719 = vmatprep.subr.bf16.mxu0 0
        %720 = vmatpush1.bf16.xpose.msra.mxu0 %v717
        %721 = vmatprep.subr.bf16.mxu0 0
        %722 = vmatpush1.bf16.xpose.msra.mxu0 0
        %723 = vmatprep.subr.bf16.mxu0 0
        %724 = vmatpush1.bf16.xpose.msra.mxu0 0
        %725 = vmatprep.subr.bf16.mxu0 0
        %726 = vmatpush1.bf16.xpose.msra.mxu0 0
        %727 = vmatprep.subr.bf16.mxu0 0
        %728 = vmatpush1.bf16.xpose.msra.mxu0 0
        %729 = vmatprep.subr.bf16.mxu0 0
        %730 = vmatpush1.bf16.xpose.msra.mxu0 0
        %731 = vmatprep.subr.bf16.mxu0 0
        %732 = vmatpush1.bf16.xpose.msra.mxu0 0
        %733 = vmatprep.subr.bf16.mxu0 0
        %734 = vmatpush1.bf16.xpose.msra.mxu0 0
        %735 = vmatprep.subr.bf16.mxu0 0
        %736 = vmatpush1.bf16.xpose.msra.mxu0 0
        %737 = vmatprep.subr.bf16.mxu0 0
        %738 = vmatpush1.bf16.xpose.msra.mxu0 0
        %739 = vmatprep.subr.bf16.mxu0 0
        %740 = vmatpush1.bf16.xpose.msra.mxu0 0
        %741 = vmatprep.subr.bf16.mxu0 0
        %742 = vmatpush1.bf16.xpose.msra.mxu0 0
        %743 = vmatprep.subr.bf16.mxu0 0
        %744 = vmatpush1.bf16.xpose.msra.mxu0 0
        %745 = vmatprep.subr.bf16.mxu0 0
        %746 = vmatpush1.bf16.xpose.msra.mxu0 0
        %747 = vmatprep.subr.bf16.mxu0 0
        %748 = vmatpush1.bf16.xpose.msra.mxu0 0
        %749 = vmatprep.subr.bf16.mxu0 0
        %750 = vmatpush1.bf16.xpose.msra.mxu0 0
        %751 = vmatprep.mubr.bf16.mxu0 0
        %752 = vmatmul.mubr.bf16.gmra.mrb[0].mxu0 %v714
        %v753 = vpop.f32.mrb[0].mxu0
        %v754 = vadd.f32 0.0, %v753
        %v755 = vpop.f32.mrb[0].mxu0
        %v756 = vpop.f32.mrb[0].mxu0
        %v757 = vpop.f32.mrb[0].mxu0
        %758 = vdwg.mxu0
        %v759 = vsel %vm712, %v754, -inf
        %760 = vmax.xlane.f32.xlu0 %v759
        %v761 = vpop.xlane.xlu0 %760
        %v762 = vsub.f32 %v754, %v761
        %v763 = vmul.f32 %v762, 1.442695
        %v764 = vpow.pop %v763
        %v765 = vsel %vm712, %v764, 0.0
        %766 = vadd.xlane.f32.xlu0 %v765
        %v767 = vpop.xlane.xlu0 %766
        %v768 = vrcp.pop %v767
        %v769 = vmul.f32 %v764, %v768
        %v770 = vpack.c.bf16 %v769, %v769
        %vm771 = vcmask 60416
        %772 = vst.msk [vmem:[%s612] sm:$0xf] %vm771, %v770
        %773 = vrot.lane.b32.xlu0 %v708, 64
        %v774 = vpop.permute.xlu0 %773
        %v776 = vsel %vm712, %v770, 0
        %vm778 = vcmask 1043456
        %v780 = vsel %vm778, %v774, 0
        %782 = vmatprep.subr.bf16.mxu0 0
        %783 = vmatpush1.bf16.msra.mxu0 %v780
        %784 = vmatprep.subr.bf16.mxu0 0
        %785 = vmatpush1.bf16.msra.mxu0 0
        %786 = vmatprep.subr.bf16.mxu0 0
        %787 = vmatpush1.bf16.msra.mxu0 0
        %788 = vmatprep.subr.bf16.mxu0 0
        %789 = vmatpush1.bf16.msra.mxu0 0
        %790 = vmatprep.subr.bf16.mxu0 0
        %791 = vmatpush1.bf16.msra.mxu0 0
        %792 = vmatprep.subr.bf16.mxu0 0
        %793 = vmatpush1.bf16.msra.mxu0 0
        %794 = vmatprep.subr.bf16.mxu0 0
        %795 = vmatpush1.bf16.msra.mxu0 0
        %796 = vmatprep.subr.bf16.mxu0 0
        %797 = vmatpush1.bf16.msra.mxu0 0
        %798 = vmatprep.subr.bf16.mxu0 0
        %799 = vmatpush1.bf16.msra.mxu0 0
        %800 = vmatprep.subr.bf16.mxu0 0
        %801 = vmatpush1.bf16.msra.mxu0 0
        %802 = vmatprep.subr.bf16.mxu0 0
        %803 = vmatpush1.bf16.msra.mxu0 0
        %804 = vmatprep.subr.bf16.mxu0 0
        %805 = vmatpush1.bf16.msra.mxu0 0
        %806 = vmatprep.subr.bf16.mxu0 0
        %807 = vmatpush1.bf16.msra.mxu0 0
        %808 = vmatprep.subr.bf16.mxu0 0
        %809 = vmatpush1.bf16.msra.mxu0 0
        %810 = vmatprep.subr.bf16.mxu0 0
        %811 = vmatpush1.bf16.msra.mxu0 0
        %812 = vmatprep.subr.bf16.mxu0 0
        %813 = vmatpush1.bf16.msra.mxu0 0
        %814 = vmatprep.mubr.bf16.mxu0 0
        %815 = vmatmul.mubr.bf16.gmra.mrb[0].mxu0 %v776
        %v816 = vpop.f32.mrb[0].mxu0
        %v817 = vadd.f32 0.0, %v816
        %v818 = vpop.f32.mrb[0].mxu0
        %v819 = vpop.f32.mrb[0].mxu0
        %v820 = vpop.f32.mrb[0].mxu0
        %821 = vdwg.mxu0
        %v822 = vpack.c.bf16 %v817, %v817
        %823 = vst.msk [vmem:[#allocation2] sm:$0xf] %vm771, %v822
        %825 = vrot.lane.b32.xlu0 %v707, 120
        %v826 = vpop.permute.xlu0 %825
        %827 = vrot.lane.b32.xlu0 %v708, 88
        %v828 = vpop.permute.xlu0 %827
        %v830 = vsel %vm712, %v826, 0
        %v833 = vsel %vm712, %v828, 0
        %835 = vmatprep.subr.bf16.mxu0 0
        %836 = vmatpush1.bf16.xpose.msra.mxu0 %v833
        %837 = vmatprep.subr.bf16.mxu0 0
        %838 = vmatpush1.bf16.xpose.msra.mxu0 0
        %839 = vmatprep.subr.bf16.mxu0 0
        %840 = vmatpush1.bf16.xpose.msra.mxu0 0
        %841 = vmatprep.subr.bf16.mxu0 0
        %842 = vmatpush1.bf16.xpose.msra.mxu0 0
        %843 = vmatprep.subr.bf16.mxu0 0
        %844 = vmatpush1.bf16.xpose.msra.mxu0 0
        %845 = vmatprep.subr.bf16.mxu0 0
        %846 = vmatpush1.bf16.xpose.msra.mxu0 0
        %847 = vmatprep.subr.bf16.mxu0 0
        %848 = vmatpush1.bf16.xpose.msra.mxu0 0
        %849 = vmatprep.subr.bf16.mxu0 0
        %850 = vmatpush1.bf16.xpose.msra.mxu0 0
        %851 = vmatprep.subr.bf16.mxu0 0
        %852 = vmatpush1.bf16.xpose.msra.mxu0 0
        %853 = vmatprep.subr.bf16.mxu0 0
        %854 = vmatpush1.bf16.xpose.msra.mxu0 0
        %855 = vmatprep.subr.bf16.mxu0 0
        %856 = vmatpush1.bf16.xpose.msra.mxu0 0
        %857 = vmatprep.subr.bf16.mxu0 0
        %858 = vmatpush1.bf16.xpose.msra.mxu0 0
        %859 = vmatprep.subr.bf16.mxu0 0
        %860 = vmatpush1.bf16.xpose.msra.mxu0 0
        %861 = vmatprep.subr.bf16.mxu0 0
        %862 = vmatpush1.bf16.xpose.msra.mxu0 0
        %863 = vmatprep.subr.bf16.mxu0 0
        %864 = vmatpush1.bf16.xpose.msra.mxu0 0
        %865 = vmatprep.subr.bf16.mxu0 0
        %866 = vmatpush1.bf16.xpose.msra.mxu0 0
        %867 = vmatprep.mubr.bf16.mxu0 0
        %868 = vmatmul.mubr.bf16.gmra.mrb[0].mxu0 %v830
        %v869 = vpop.f32.mrb[0].mxu0
        %v870 = vadd.f32 0.0, %v869
        %v871 = vpop.f32.mrb[0].mxu0
        %v872 = vpop.f32.mrb[0].mxu0
        %v873 = vpop.f32.mrb[0].mxu0
        %874 = vdwg.mxu0
        %v875 = vsel %vm712, %v870, -inf
        %876 = vmax.xlane.f32.xlu0 %v875
        %v877 = vpop.xlane.xlu0 %876
        %v878 = vsub.f32 %v870, %v877
        %v879 = vmul.f32 %v878, 1.442695
        %v880 = vpow.pop %v879
        %v881 = vsel %vm712, %v880, 0.0
        %882 = vadd.xlane.f32.xlu0 %v881
        %v883 = vpop.xlane.xlu0 %882
        %v884 = vrcp.pop %v883
        %v885 = vmul.f32 %v880, %v884
        %v886 = vpack.c.bf16 %v885, %v885
        %s887 = scalar_lea.vmem %s612, 4 [#allocation24]
        %888 = vst.msk [vmem:[%s887] sm:$0xf] %vm771, %v886
        %889 = vrot.lane.b32.xlu0 %v708, 56
        %v890 = vpop.permute.xlu0 %889
        %v892 = vsel %vm712, %v886, 0
        %v895 = vsel %vm778, %v890, 0
        %897 = vmatprep.subr.bf16.mxu0 0
        %898 = vmatpush1.bf16.msra.mxu0 %v895
        %899 = vmatprep.subr.bf16.mxu0 0
        %900 = vmatpush1.bf16.msra.mxu0 0
        %901 = vmatprep.subr.bf16.mxu0 0
        %902 = vmatpush1.bf16.msra.mxu0 0
        %903 = vmatprep.subr.bf16.mxu0 0
        %904 = vmatpush1.bf16.msra.mxu0 0
        %905 = vmatprep.subr.bf16.mxu0 0
        %906 = vmatpush1.bf16.msra.mxu0 0
        %907 = vmatprep.subr.bf16.mxu0 0
        %908 = vmatpush1.bf16.msra.mxu0 0
        %909 = vmatprep.subr.bf16.mxu0 0
        %910 = vmatpush1.bf16.msra.mxu0 0
        %911 = vmatprep.subr.bf16.mxu0 0
        %912 = vmatpush1.bf16.msra.mxu0 0
        %913 = vmatprep.subr.bf16.mxu0 0
        %914 = vmatpush1.bf16.msra.mxu0 0
        %915 = vmatprep.subr.bf16.mxu0 0
        %916 = vmatpush1.bf16.msra.mxu0 0
        %917 = vmatprep.subr.bf16.mxu0 0
        %918 = vmatpush1.bf16.msra.mxu0 0
        %919 = vmatprep.subr.bf16.mxu0 0
        %920 = vmatpush1.bf16.msra.mxu0 0
        %921 = vmatprep.subr.bf16.mxu0 0
        %922 = vmatpush1.bf16.msra.mxu0 0
        %923 = vmatprep.subr.bf16.mxu0 0
        %924 = vmatpush1.bf16.msra.mxu0 0
        %925 = vmatprep.subr.bf16.mxu0 0
        %926 = vmatpush1.bf16.msra.mxu0 0
        %927 = vmatprep.subr.bf16.mxu0 0
        %928 = vmatpush1.bf16.msra.mxu0 0
        %929 = vmatprep.mubr.bf16.mxu0 0
        %930 = vmatmul.mubr.bf16.gmra.mrb[0].mxu0 %v892
        %v931 = vpop.f32.mrb[0].mxu0
        %v932 = vadd.f32 0.0, %v931
        %v933 = vpop.f32.mrb[0].mxu0
        %v934 = vpop.f32.mrb[0].mxu0
        %v935 = vpop.f32.mrb[0].mxu0
        %936 = vdwg.mxu0
        %v937 = vpack.c.bf16 %v932, %v932
        %v939 = vunpack.c.l.b16 %v937
        %v940 = vpack.c.b16 %v939, %v939
        %941 = vrot.lane.b32.xlu0 %v940, 8
        %v942 = vpop.permute.xlu0 %941
        %vm944 = vcmask 126016
        %945 = vst.msk [vmem:[#allocation2] sm:$0xf] %vm944, %v942
        %946 = vrot.lane.b32.xlu0 %v707, 112
        %v947 = vpop.permute.xlu0 %946
        %948 = vrot.lane.b32.xlu0 %v708, 80
        %v949 = vpop.permute.xlu0 %948
        %v951 = vsel %vm712, %v947, 0
        %v954 = vsel %vm712, %v949, 0
        %956 = vmatprep.subr.bf16.mxu0 0
        %957 = vmatpush1.bf16.xpose.msra.mxu0 %v954
        %958 = vmatprep.subr.bf16.mxu0 0
        %959 = vmatpush1.bf16.xpose.msra.mxu0 0
        %960 = vmatprep.subr.bf16.mxu0 0
        %961 = vmatpush1.bf16.xpose.msra.mxu0 0
        %962 = vmatprep.subr.bf16.mxu0 0
        %963 = vmatpush1.bf16.xpose.msra.mxu0 0
        %964 = vmatprep.subr.bf16.mxu0 0
        %965 = vmatpush1.bf16.xpose.msra.mxu0 0
        %966 = vmatprep.subr.bf16.mxu0 0
        %967 = vmatpush1.bf16.xpose.msra.mxu0 0
        %968 = vmatprep.subr.bf16.mxu0 0
        %969 = vmatpush1.bf16.xpose.msra.mxu0 0
        %970 = vmatprep.subr.bf16.mxu0 0
        %971 = vmatpush1.bf16.xpose.msra.mxu0 0
        %972 = vmatprep.subr.bf16.mxu0 0
        %973 = vmatpush1.bf16.xpose.msra.mxu0 0
        %974 = vmatprep.subr.bf16.mxu0 0
        %975 = vmatpush1.bf16.xpose.msra.mxu0 0
        %976 = vmatprep.subr.bf16.mxu0 0
        %977 = vmatpush1.bf16.xpose.msra.mxu0 0
        %978 = vmatprep.subr.bf16.mxu0 0
        %979 = vmatpush1.bf16.xpose.msra.mxu0 0
        %980 = vmatprep.subr.bf16.mxu0 0
        %981 = vmatpush1.bf16.xpose.msra.mxu0 0
        %982 = vmatprep.subr.bf16.mxu0 0
        %983 = vmatpush1.bf16.xpose.msra.mxu0 0
        %984 = vmatprep.subr.bf16.mxu0 0
        %985 = vmatpush1.bf16.xpose.msra.mxu0 0
        %986 = vmatprep.subr.bf16.mxu0 0
        %987 = vmatpush1.bf16.xpose.msra.mxu0 0
        %988 = vmatprep.mubr.bf16.mxu0 0
        %989 = vmatmul.mubr.bf16.gmra.mrb[0].mxu0 %v951
        %v990 = vpop.f32.mrb[0].mxu0
        %v991 = vadd.f32 0.0, %v990
        %v992 = vpop.f32.mrb[0].mxu0
        %v993 = vpop.f32.mrb[0].mxu0
        %v994 = vpop.f32.mrb[0].mxu0
        %995 = vdwg.mxu0
        %v996 = vsel %vm712, %v991, -inf
        %997 = vmax.xlane.f32.xlu0 %v996
        %v998 = vpop.xlane.xlu0 %997
        %v999 = vsub.f32 %v991, %v998
        %v1000 = vmul.f32 %v999, 1.442695
        %v1001 = vpow.pop %v1000
        %v1002 = vsel %vm712, %v1001, 0.0
        %1003 = vadd.xlane.f32.xlu0 %v1002
        %v1004 = vpop.xlane.xlu0 %1003
        %v1005 = vrcp.pop %v1004
        %v1006 = vmul.f32 %v1001, %v1005
        %v1007 = vpack.c.bf16 %v1006, %v1006
        %s1008 = scalar_lea.vmem %s612, 8 [#allocation24]
        %1009 = vst.msk [vmem:[%s1008] sm:$0xf] %vm771, %v1007
        %1010 = vrot.lane.b32.xlu0 %v708, 48
        %v1011 = vpop.permute.xlu0 %1010
        %v1013 = vsel %vm712, %v1007, 0
        %v1016 = vsel %vm778, %v1011, 0
        %1018 = vmatprep.subr.bf16.mxu0 0
        %1019 = vmatpush1.bf16.msra.mxu0 %v1016
        %1020 = vmatprep.subr.bf16.mxu0 0
        %1021 = vmatpush1.bf16.msra.mxu0 0
        %1022 = vmatprep.subr.bf16.mxu0 0
        %1023 = vmatpush1.bf16.msra.mxu0 0
        %1024 = vmatprep.subr.bf16.mxu0 0
        %1025 = vmatpush1.bf16.msra.mxu0 0
        %1026 = vmatprep.subr.bf16.mxu0 0
        %1027 = vmatpush1.bf16.msra.mxu0 0
        %1028 = vmatprep.subr.bf16.mxu0 0
        %1029 = vmatpush1.bf16.msra.mxu0 0
        %1030 = vmatprep.subr.bf16.mxu0 0
        %1031 = vmatpush1.bf16.msra.mxu0 0
        %1032 = vmatprep.subr.bf16.mxu0 0
        %1033 = vmatpush1.bf16.msra.mxu0 0
        %1034 = vmatprep.subr.bf16.mxu0 0
        %1035 = vmatpush1.bf16.msra.mxu0 0
        %1036 = vmatprep.subr.bf16.mxu0 0
        %1037 = vmatpush1.bf16.msra.mxu0 0
        %1038 = vmatprep.subr.bf16.mxu0 0
        %1039 = vmatpush1.bf16.msra.mxu0 0
        %1040 = vmatprep.subr.bf16.mxu0 0
        %1041 = vmatpush1.bf16.msra.mxu0 0
        %1042 = vmatprep.subr.bf16.mxu0 0
        %1043 = vmatpush1.bf16.msra.mxu0 0
        %1044 = vmatprep.subr.bf16.mxu0 0
        %1045 = vmatpush1.bf16.msra.mxu0 0
        %1046 = vmatprep.subr.bf16.mxu0 0
        %1047 = vmatpush1.bf16.msra.mxu0 0
        %1048 = vmatprep.subr.bf16.mxu0 0
        %1049 = vmatpush1.bf16.msra.mxu0 0
        %1050 = vmatprep.mubr.bf16.mxu0 0
        %1051 = vmatmul.mubr.bf16.gmra.mrb[0].mxu0 %v1013
        %v1052 = vpop.f32.mrb[0].mxu0
        %v1053 = vadd.f32 0.0, %v1052
        %v1054 = vpop.f32.mrb[0].mxu0
        %v1055 = vpop.f32.mrb[0].mxu0
        %v1056 = vpop.f32.mrb[0].mxu0
        %1057 = vdwg.mxu0
        %v1058 = vpack.c.bf16 %v1053, %v1053
        %v1060 = vunpack.c.l.b16 %v1058
        %v1061 = vpack.c.b16 %v1060, %v1060
        %1062 = vrot.lane.b32.xlu0 %v1061, 16
        %v1063 = vpop.permute.xlu0 %1062
        %vm1065 = vcmask 191616
        %1066 = vst.msk [vmem:[#allocation2] sm:$0xf] %vm1065, %v1063
        %1067 = vrot.lane.b32.xlu0 %v707, 104
        %v1068 = vpop.permute.xlu0 %1067
        %1069 = vrot.lane.b32.xlu0 %v708, 72
        %v1070 = vpop.permute.xlu0 %1069
        %v1072 = vsel %vm712, %v1068, 0
        %v1075 = vsel %vm712, %v1070, 0
        %1077 = vmatprep.subr.bf16.mxu0 0
        %1078 = vmatpush1.bf16.xpose.msra.mxu0 %v1075
        %1079 = vmatprep.subr.bf16.mxu0 0
        %1080 = vmatpush1.bf16.xpose.msra.mxu0 0
        %1081 = vmatprep.subr.bf16.mxu0 0
        %1082 = vmatpush1.bf16.xpose.msra.mxu0 0
        %1083 = vmatprep.subr.bf16.mxu0 0
        %1084 = vmatpush1.bf16.xpose.msra.mxu0 0
        %1085 = vmatprep.subr.bf16.mxu0 0
        %1086 = vmatpush1.bf16.xpose.msra.mxu0 0
        %1087 = vmatprep.subr.bf16.mxu0 0
        %1088 = vmatpush1.bf16.xpose.msra.mxu0 0
        %1089 = vmatprep.subr.bf16.mxu0 0
        %1090 = vmatpush1.bf16.xpose.msra.mxu0 0
        %1091 = vmatprep.subr.bf16.mxu0 0
        %1092 = vmatpush1.bf16.xpose.msra.mxu0 0
        %1093 = vmatprep.subr.bf16.mxu0 0
        %1094 = vmatpush1.bf16.xpose.msra.mxu0 0
        %1095 = vmatprep.subr.bf16.mxu0 0
        %1096 = vmatpush1.bf16.xpose.msra.mxu0 0
        %1097 = vmatprep.subr.bf16.mxu0 0
        %1098 = vmatpush1.bf16.xpose.msra.mxu0 0
        %1099 = vmatprep.subr.bf16.mxu0 0
        %1100 = vmatpush1.bf16.xpose.msra.mxu0 0
        %1101 = vmatprep.subr.bf16.mxu0 0
        %1102 = vmatpush1.bf16.xpose.msra.mxu0 0
        %1103 = vmatprep.subr.bf16.mxu0 0
        %1104 = vmatpush1.bf16.xpose.msra.mxu0 0
        %1105 = vmatprep.subr.bf16.mxu0 0
        %1106 = vmatpush1.bf16.xpose.msra.mxu0 0
        %1107 = vmatprep.subr.bf16.mxu0 0
        %1108 = vmatpush1.bf16.xpose.msra.mxu0 0
        %1109 = vmatprep.mubr.bf16.mxu0 0
        %1110 = vmatmul.mubr.bf16.gmra.mrb[0].mxu0 %v1072
        %v1111 = vpop.f32.mrb[0].mxu0
        %v1112 = vadd.f32 0.0, %v1111
        %v1113 = vpop.f32.mrb[0].mxu0
        %v1114 = vpop.f32.mrb[0].mxu0
        %v1115 = vpop.f32.mrb[0].mxu0
        %1116 = vdwg.mxu0
        %v1117 = vsel %vm712, %v1112, -inf
        %1118 = vmax.xlane.f32.xlu0 %v1117
        %v1119 = vpop.xlane.xlu0 %1118
        %v1120 = vsub.f32 %v1112, %v1119
        %v1121 = vmul.f32 %v1120, 1.442695
        %v1122 = vpow.pop %v1121
        %v1123 = vsel %vm712, %v1122, 0.0
        %1124 = vadd.xlane.f32.xlu0 %v1123
        %v1125 = vpop.xlane.xlu0 %1124
        %v1126 = vrcp.pop %v1125
        %v1127 = vmul.f32 %v1122, %v1126
        %v1128 = vpack.c.bf16 %v1127, %v1127
        %s1129 = scalar_lea.vmem %s612, 12 [#allocation24]
        %1130 = vst.msk [vmem:[%s1129] sm:$0xf] %vm771, %v1128
        %1131 = vrot.lane.b32.xlu0 %v708, 40
        %v1132 = vpop.permute.xlu0 %1131
        %v1134 = vsel %vm712, %v1128, 0
        %v1137 = vsel %vm778, %v1132, 0
        %1139 = vmatprep.subr.bf16.mxu0 0
        %1140 = vmatpush1.bf16.msra.mxu0 %v1137
        %1141 = vmatprep.subr.bf16.mxu0 0
        %1142 = vmatpush1.bf16.msra.mxu0 0
        %1143 = vmatprep.subr.bf16.mxu0 0
        %1144 = vmatpush1.bf16.msra.mxu0 0
        %1145 = vmatprep.subr.bf16.mxu0 0
        %1146 = vmatpush1.bf16.msra.mxu0 0
        %1147 = vmatprep.subr.bf16.mxu0 0
        %1148 = vmatpush1.bf16.msra.mxu0 0
        %1149 = vmatprep.subr.bf16.mxu0 0
        %1150 = vmatpush1.bf16.msra.mxu0 0
        %1151 = vmatprep.subr.bf16.mxu0 0
        %1152 = vmatpush1.bf16.msra.mxu0 0
        %1153 = vmatprep.subr.bf16.mxu0 0
        %1154 = vmatpush1.bf16.msra.mxu0 0
        %1155 = vmatprep.subr.bf16.mxu0 0
        %1156 = vmatpush1.bf16.msra.mxu0 0
        %1157 = vmatprep.subr.bf16.mxu0 0
        %1158 = vmatpush1.bf16.msra.mxu0 0
        %1159 = vmatprep.subr.bf16.mxu0 0
        %1160 = vmatpush1.bf16.msra.mxu0 0
        %1161 = vmatprep.subr.bf16.mxu0 0
        %1162 = vmatpush1.bf16.msra.mxu0 0
        %1163 = vmatprep.subr.bf16.mxu0 0
        %1164 = vmatpush1.bf16.msra.mxu0 0
        %1165 = vmatprep.subr.bf16.mxu0 0
        %1166 = vmatpush1.bf16.msra.mxu0 0
        %1167 = vmatprep.subr.bf16.mxu0 0
        %1168 = vmatpush1.bf16.msra.mxu0 0
        %1169 = vmatprep.subr.bf16.mxu0 0
        %1170 = vmatpush1.bf16.msra.mxu0 0
        %1171 = vmatprep.mubr.bf16.mxu0 0
        %1172 = vmatmul.mubr.bf16.gmra.mrb[0].mxu0 %v1134
        %v1173 = vpop.f32.mrb[0].mxu0
        %v1174 = vadd.f32 0.0, %v1173
        %v1175 = vpop.f32.mrb[0].mxu0
        %v1176 = vpop.f32.mrb[0].mxu0
        %v1177 = vpop.f32.mrb[0].mxu0
        %1178 = vdwg.mxu0
        %v1179 = vpack.c.bf16 %v1174, %v1174
        %v1181 = vunpack.c.l.b16 %v1179
        %v1182 = vpack.c.b16 %v1181, %v1181
        %1183 = vrot.lane.b32.xlu0 %v1182, 24
        %v1184 = vpop.permute.xlu0 %1183
        %vm1186 = vcmask 257216
        %1187 = vst.msk [vmem:[#allocation2] sm:$0xf] %vm1186, %v1184
        %v1188 = vld [vmem:[#allocation2] sm:$0xf]
        %v1189 = vld [vmem:[#allocation11] sm:$0xf]
        %v1190 = vld [vmem:[#allocation11 + $0x4] sm:$0xf]
        %v1191 = vld [vmem:[#allocation11 + $0x8] sm:$0xf]
        %v1192 = vld [vmem:[#allocation11 + $0xc] sm:$0xf]
        %v1193 = vld [vmem:[#allocation12] sm:$0x1]
        %v1195 = vlaneseq
        %v1196 = vshrl.u32 %v1195, 7
        %v1197 = vsub.s32 0, %v1196
        %v1198 = vrot.slane %v1193, %v1197
        %v1204 = vunpack.c.l.b16 %v1189
        %v1205 = vunpack.c.l.b16 %v1190
        %v1206 = vunpack.c.l.b16 %v1191
        %v1207 = vunpack.c.l.b16 %v1192
        %v1208 = vpack.c.b16 %v1205, %v1204
        %v1209 = vpack.c.b16 %v1207, %v1206
        %v1213 = vsel %vm617, %v1188, 0
        %1215 = vmatprep.subr.bf16.mxu0 0
        %1216 = vmatpush1.bf16.msra.mxu0 %v1208
        %1217 = vmatprep.subr.bf16.mxu0 0
        %1218 = vmatpush1.bf16.msra.mxu0 %v1209
        %1219 = vmatprep.subr.bf16.mxu0 0
        %1220 = vmatpush1.bf16.msra.mxu0 0
        %1221 = vmatprep.subr.bf16.mxu0 0
        %1222 = vmatpush1.bf16.msra.mxu0 0
        %1223 = vmatprep.subr.bf16.mxu0 0
        %1224 = vmatpush1.bf16.msra.mxu0 0
        %1225 = vmatprep.subr.bf16.mxu0 0
        %1226 = vmatpush1.bf16.msra.mxu0 0
        %1227 = vmatprep.subr.bf16.mxu0 0
        %1228 = vmatpush1.bf16.msra.mxu0 0
        %1229 = vmatprep.subr.bf16.mxu0 0
        %1230 = vmatpush1.bf16.msra.mxu0 0
        %1231 = vmatprep.subr.bf16.mxu0 0
        %1232 = vmatpush1.bf16.msra.mxu0 0
        %1233 = vmatprep.subr.bf16.mxu0 0
        %1234 = vmatpush1.bf16.msra.mxu0 0
        %1235 = vmatprep.subr.bf16.mxu0 0
        %1236 = vmatpush1.bf16.msra.mxu0 0
        %1237 = vmatprep.subr.bf16.mxu0 0
        %1238 = vmatpush1.bf16.msra.mxu0 0
        %1239 = vmatprep.subr.bf16.mxu0 0
        %1240 = vmatpush1.bf16.msra.mxu0 0
        %1241 = vmatprep.subr.bf16.mxu0 0
        %1242 = vmatpush1.bf16.msra.mxu0 0
        %1243 = vmatprep.subr.bf16.mxu0 0
        %1244 = vmatpush1.bf16.msra.mxu0 0
        %1245 = vmatprep.subr.bf16.mxu0 0
        %1246 = vmatpush1.bf16.msra.mxu0 0
        %1247 = vmatprep.mubr.bf16.mxu0 0
        %1248 = vmatmul.mubr.bf16.gmra.mrb[0].mxu0 %v1213
        %v1249 = vpop.f32.mrb[0].mxu0
        %v1250 = vadd.f32 %v1198, %v1249
        %v1251 = vpop.f32.mrb[0].mxu0
        %v1252 = vpop.f32.mrb[0].mxu0
        %v1253 = vpop.f32.mrb[0].mxu0
        %1254 = vdwg.mxu0
        %v1255 = vadd.f32 %v614, %v1250
        %v1256 = vld [vmem:[#allocation14] sm:$0x1]
        %v1257 = vld [vmem:[#allocation15] sm:$0x1]
        %v1258 = vsel %vm617, %v1255, 0.0
        %1259 = vadd.xlane.f32.xlu0 %v1258
        %v1260 = vpop.xlane.xlu0 %1259
        %v1261 = vmul.f32 %v1260, %v621
        %v1262 = vsub.f32 %v1255, %v1261
        %v1263 = vmul.f32 %v1262, %v1262
        %v1264 = vsel %vm617, %v1263, 0.0
        %1265 = vadd.xlane.f32.xlu0 %v1264
        %v1266 = vpop.xlane.xlu0 %1265
        %v1267 = vmul.f32 %v1266, %v621
        %v1268 = vadd.f32 %v1267, 1e-05
        %v1269 = vrsqrt.pop %v1268
        %v1270 = vmul.f32 %v1262, %v1269
        %v1272 = vlaneseq
        %v1273 = vshrl.u32 %v1272, 7
        %v1274 = vsub.s32 0, %v1273
        %v1275 = vrot.slane %v1256, %v1274
        %v1277 = vmul.f32 %v1270, %v1275
        %v1279 = vlaneseq
        %v1280 = vshrl.u32 %v1279, 7
        %v1281 = vsub.s32 0, %v1280
        %v1282 = vrot.slane %v1257, %v1281
        %v1284 = vadd.f32 %v1277, %v1282
        %v1285 = vpack.c.bf16 %v1284, %v1284
        %v1286 = vld [vmem:[#allocation17] sm:$0xf]
        %v1287 = vld [vmem:[#allocation17 + $0x4] sm:$0xf]
        %v1288 = vld [vmem:[#allocation17 + $0x8] sm:$0xf]
        %v1289 = vld [vmem:[#allocation17 + $0xc] sm:$0xf]
        %v1290 = vld [vmem:[#allocation18] sm:$0x1]
        %v1292 = vlaneseq
        %v1293 = vshrl.u32 %v1292, 7
        %v1294 = vsub.s32 0, %v1293
        %v1295 = vrot.slane %v1290, %v1294
        %v1301 = vunpack.c.l.b16 %v1286
        %v1302 = vunpack.c.l.b16 %v1287
        %v1303 = vunpack.c.l.b16 %v1288
        %v1304 = vunpack.c.l.b16 %v1289
        %v1305 = vpack.c.b16 %v1302, %v1301
        %v1306 = vpack.c.b16 %v1304, %v1303
        %v1310 = vsel %vm617, %v1285, 0
        %1312 = vmatprep.subr.bf16.mxu0 0
        %1313 = vmatpush1.bf16.msra.mxu0 %v1305
        %1314 = vmatprep.subr.bf16.mxu0 0
        %1315 = vmatpush1.bf16.msra.mxu0 %v1306
        %1316 = vmatprep.subr.bf16.mxu0 0
        %1317 = vmatpush1.bf16.msra.mxu0 0
        %1318 = vmatprep.subr.bf16.mxu0 0
        %1319 = vmatpush1.bf16.msra.mxu0 0
        %1320 = vmatprep.subr.bf16.mxu0 0
        %1321 = vmatpush1.bf16.msra.mxu0 0
        %1322 = vmatprep.subr.bf16.mxu0 0
        %1323 = vmatpush1.bf16.msra.mxu0 0
        %1324 = vmatprep.subr.bf16.mxu0 0
        %1325 = vmatpush1.bf16.msra.mxu0 0
        %1326 = vmatprep.subr.bf16.mxu0 0
        %1327 = vmatpush1.bf16.msra.mxu0 0
        %1328 = vmatprep.subr.bf16.mxu0 0
        %1329 = vmatpush1.bf16.msra.mxu0 0
        %1330 = vmatprep.subr.bf16.mxu0 0
        %1331 = vmatpush1.bf16.msra.mxu0 0
        %1332 = vmatprep.subr.bf16.mxu0 0
        %1333 = vmatpush1.bf16.msra.mxu0 0
        %1334 = vmatprep.subr.bf16.mxu0 0
        %1335 = vmatpush1.bf16.msra.mxu0 0
        %1336 = vmatprep.subr.bf16.mxu0 0
        %1337 = vmatpush1.bf16.msra.mxu0 0
        %1338 = vmatprep.subr.bf16.mxu0 0
        %1339 = vmatpush1.bf16.msra.mxu0 0
        %1340 = vmatprep.subr.bf16.mxu0 0
        %1341 = vmatpush1.bf16.msra.mxu0 0
        %1342 = vmatprep.subr.bf16.mxu0 0
        %1343 = vmatpush1.bf16.msra.mxu0 0
        %1344 = vmatprep.mubr.bf16.mxu0 0
        %1345 = vmatmul.mubr.bf16.gmra.mrb[0].mxu0 %v1310
        %v1346 = vpop.f32.mrb[0].mxu0
        %v1347 = vadd.f32 %v1295, %v1346
        %v1348 = vpop.f32.mrb[0].mxu0
        %v1349 = vpop.f32.mrb[0].mxu0
        %v1350 = vpop.f32.mrb[0].mxu0
        %1351 = vdwg.mxu0
        %v1352 = vmul.f32 %v1347, 0.5
        %v1353 = vmul.f32 %v1347, 0.70710677
        %v1354 = verf.f32.pop %v1353
        %v1355 = vadd.f32 %v1354, 1.0
        %v1356 = vmul.f32 %v1352, %v1355
        %v1357 = vpack.c.bf16 %v1356, %v1356
        %v1358 = vld [vmem:[#allocation20] sm:$0xf]
        %v1359 = vld [vmem:[#allocation20 + $0x4] sm:$0xf]
        %v1360 = vld [vmem:[#allocation20 + $0x8] sm:$0xf]
        %v1361 = vld [vmem:[#allocation20 + $0xc] sm:$0xf]
        %v1362 = vld [vmem:[#allocation20 + $0x10] sm:$0xf]
        %v1363 = vld [vmem:[#allocation20 + $0x14] sm:$0xf]
        %v1364 = vld [vmem:[#allocation20 + $0x18] sm:$0xf]
        %v1365 = vld [vmem:[#allocation20 + $0x1c] sm:$0xf]
        %v1366 = vld [vmem:[#allocation20 + $0x20] sm:$0xf]
        %v1367 = vld [vmem:[#allocation20 + $0x24] sm:$0xf]
        %v1368 = vld [vmem:[#allocation20 + $0x28] sm:$0xf]
        %v1369 = vld [vmem:[#allocation20 + $0x2c] sm:$0xf]
        %v1370 = vld [vmem:[#allocation20 + $0x30] sm:$0xf]
        %v1371 = vld [vmem:[#allocation20 + $0x34] sm:$0xf]
        %v1372 = vld [vmem:[#allocation20 + $0x38] sm:$0xf]
        %v1373 = vld [vmem:[#allocation20 + $0x3c] sm:$0xf]
        %v1374 = vld [vmem:[#allocation21] sm:$0x1]
        %v1376 = vlaneseq
        %v1377 = vshrl.u32 %v1376, 7
        %v1378 = vsub.s32 0, %v1377
        %v1379 = vrot.slane %v1374, %v1378
        %v1397 = vunpack.c.l.b16 %v1358
        %v1398 = vunpack.c.l.b16 %v1359
        %v1399 = vunpack.c.l.b16 %v1360
        %v1400 = vunpack.c.l.b16 %v1361
        %v1401 = vunpack.c.l.b16 %v1362
        %v1402 = vunpack.c.l.b16 %v1363
        %v1403 = vunpack.c.l.b16 %v1364
        %v1404 = vunpack.c.l.b16 %v1365
        %v1405 = vunpack.c.l.b16 %v1366
        %v1406 = vunpack.c.l.b16 %v1367
        %v1407 = vunpack.c.l.b16 %v1368
        %v1408 = vunpack.c.l.b16 %v1369
        %v1409 = vunpack.c.l.b16 %v1370
        %v1410 = vunpack.c.l.b16 %v1371
        %v1411 = vunpack.c.l.b16 %v1372
        %v1412 = vunpack.c.l.b16 %v1373
        %v1413 = vpack.c.b16 %v1398, %v1397
        %v1414 = vpack.c.b16 %v1400, %v1399
        %v1415 = vpack.c.b16 %v1402, %v1401
        %v1416 = vpack.c.b16 %v1404, %v1403
        %v1417 = vpack.c.b16 %v1406, %v1405
        %v1418 = vpack.c.b16 %v1408, %v1407
        %v1419 = vpack.c.b16 %v1410, %v1409
        %v1420 = vpack.c.b16 %v1412, %v1411
        %1429 = vmatprep.subr.bf16.mxu0 0
        %1430 = vmatpush1.bf16.msra.mxu0 %v1413
        %1431 = vmatprep.subr.bf16.mxu0 0
        %1432 = vmatpush1.bf16.msra.mxu0 %v1414
        %1433 = vmatprep.subr.bf16.mxu0 0
        %1434 = vmatpush1.bf16.msra.mxu0 %v1415
        %1435 = vmatprep.subr.bf16.mxu0 0
        %1436 = vmatpush1.bf16.msra.mxu0 %v1416
        %1437 = vmatprep.subr.bf16.mxu0 0
        %1438 = vmatpush1.bf16.msra.mxu0 %v1417
        %1439 = vmatprep.subr.bf16.mxu0 0
        %1440 = vmatpush1.bf16.msra.mxu0 %v1418
        %1441 = vmatprep.subr.bf16.mxu0 0
        %1442 = vmatpush1.bf16.msra.mxu0 %v1419
        %1443 = vmatprep.subr.bf16.mxu0 0
        %1444 = vmatpush1.bf16.msra.mxu0 %v1420
        %1445 = vmatprep.subr.bf16.mxu0 0
        %1446 = vmatpush1.bf16.msra.mxu0 0
        %1447 = vmatprep.subr.bf16.mxu0 0
        %1448 = vmatpush1.bf16.msra.mxu0 0
        %1449 = vmatprep.subr.bf16.mxu0 0
        %1450 = vmatpush1.bf16.msra.mxu0 0
        %1451 = vmatprep.subr.bf16.mxu0 0
        %1452 = vmatpush1.bf16.msra.mxu0 0
        %1453 = vmatprep.subr.bf16.mxu0 0
        %1454 = vmatpush1.bf16.msra.mxu0 0
        %1455 = vmatprep.subr.bf16.mxu0 0
        %1456 = vmatpush1.bf16.msra.mxu0 0
        %1457 = vmatprep.subr.bf16.mxu0 0
        %1458 = vmatpush1.bf16.msra.mxu0 0
        %1459 = vmatprep.subr.bf16.mxu0 0
        %1460 = vmatpush1.bf16.msra.mxu0 0
        %1461 = vmatprep.mubr.bf16.mxu0 0
        %1462 = vmatmul.mubr.bf16.gmra.mrb[0].mxu0 %v1357
        %v1463 = vpop.f32.mrb[0].mxu0
        %v1464 = vadd.f32 %v1379, %v1463
        %v1465 = vpop.f32.mrb[0].mxu0
        %v1466 = vpop.f32.mrb[0].mxu0
        %v1467 = vpop.f32.mrb[0].mxu0
        %1468 = vdwg.mxu0
        %v1469 = vadd.f32 %v1255, %v1464
        %1470 = vst.msk [vmem:[%s605] sm:$0xff] %vm617, %v1469
        %s1471 = sand.u32 %s305, 1
        %s1472 = scalar_lea.sflag [#allocation5], %s1471
        %s1473 = sand.u32 %s305, 1
        %s1474 = smul.addr %s1473, 8
        %s1475 = scalar_lea.vmem [#allocation23], %s1474
        %s1476 = sand.u32 %s331, 1
        %s1477 = scalar_lea.sflag [#allocation25], %s1476
        %s1478 = sand.u32 %s331, 1
        %s1479 = smul.addr %s1478, 16
        %s1480 = scalar_lea.vmem [#allocation24], %s1479
        // Predicated region
        $region117: #{tpu_custom_call.1} parent=67 // pred_check
          %p1481 = pneg %p315
        $region118: #{tpu_custom_call.1} parent=67 // pred_check_branch
          %1483 = sbr.rel (%p1481) target = $region120
        $region119: #{tpu_custom_call.1} parent=67 // pred_region
          %s1485 = ssub.s32 128, 128
          %1486 = vsyncadd %s1472, %s1485
          %s1487 = smul.addr %s40, 128
          %s1488 = scalar_lea.hbm %s12, %s1487
          %s1490 = sshll.u32 %s1475, 4
          %s1491 = int_to_ptr.vmem [resolvable:$true] %s1490
          %1493 = dma.vmem_to_hbm [thread:$0]  %s1491, 128, %s1488, %s1472
        $region120: #{tpu_custom_call.1} parent=67 // pred_fallthru
          _
        // Predicated region
        $region121: #{tpu_custom_call.1} parent=67 // pred_check
          %p1494 = pneg %p341
        $region122: #{tpu_custom_call.1} parent=67 // pred_check_branch
          %1496 = sbr.rel (%p1494) target = $region124
        $region123: #{tpu_custom_call.1} parent=67 // pred_region
          %s1498 = ssub.s32 256, 256
          %1499 = vsyncadd %s1477, %s1498
          %s1500 = smul.addr %s40, 4
          %s1501 = smul.addr %s1500, 64
          %s1502 = scalar_lea.hbm %s13, %s1501
          %s1503 = sshll.u32 %s1480, 4
          %s1504 = int_to_ptr.vmem [resolvable:$true] %s1503
          %1509 = dma.vmem_to_hbm [thread:$0]  %s1504, 256, %s1502, %s1477, 64, 64, 4
        $region124: #{tpu_custom_call.1} parent=67 // pred_fallthru
          _
      $region68: #{tpu_custom_call.1} parent=5 // pred_fallthru
        _
      %p1510 = scmp.le.s32.totalorder 2, %s35
      // Predicated region
      $region125: #{tpu_custom_call.1} parent=5 // pred_check
        %p1511 = pneg %p1510
      $region126: #{tpu_custom_call.1} parent=5 // pred_check_branch
        %1513 = sbr.rel (%p1511) target = $region128
      $region127: #{tpu_custom_call.1} parent=5 // pred_region
        %s1514 = ssub.s32 %s35, 2
        // Predicated region
        $region129: #{tpu_custom_call.1} parent=127 // pred_check
          %p1515 = pneg %p321
        $region130: #{tpu_custom_call.1} parent=127 // pred_check_branch
          %1517 = sbr.rel (%p1515) target = $region132
        $region131: #{tpu_custom_call.1} parent=127 // pred_region
          %s1518 = sand.u32 %s306, 1
          %s1519 = scalar_lea.sflag [#allocation5], %s1518
          %s1520 = sand.u32 %s306, 1
          %s1521 = smul.addr %s1520, 8
          %s1522 = scalar_lea.vmem [#allocation23], %s1521
          %1523 = dma.done %s1519, 128
        $region132: #{tpu_custom_call.1} parent=127 // pred_fallthru
          _
        // Predicated region
        $region133: #{tpu_custom_call.1} parent=127 // pred_check
          %p1524 = pneg %p347
        $region134: #{tpu_custom_call.1} parent=127 // pred_check_branch
          %1526 = sbr.rel (%p1524) target = $region136
        $region135: #{tpu_custom_call.1} parent=127 // pred_region
          %s1527 = sand.u32 %s332, 1
          %s1528 = scalar_lea.sflag [#allocation25], %s1527
          %s1529 = sand.u32 %s332, 1
          %s1530 = smul.addr %s1529, 16
          %s1531 = scalar_lea.vmem [#allocation24], %s1530
          %1532 = dma.done %s1528, 256
        $region136: #{tpu_custom_call.1} parent=127 // pred_fallthru
          _
      $region128: #{tpu_custom_call.1} parent=5 // pred_fallthru
        _
    $region6: #{tpu_custom_call.1} parent=1 // loop_footer
      %s39 = sadd.s32 1, %s35
    $region7: #{tpu_custom_call.1} parent=1 // loop_footer_branch
      %34 = sbr.rel target = $region3
    $region8: #{tpu_custom_call.1} parent=1 // loop_exit
      _
    %1533 = vsyncpa [#allocation4], 1
    %s1534 = scalar_lea.sflag [#allocation4], 1
    %1535 = vsyncpa %s1534, 1
    %1536 = vsyncpa [#allocation7], 1
    %1537 = vsyncpa [#allocation10], 1
    %1538 = vsyncpa [#allocation13], 1
    %1539 = vsyncpa [#allocation16], 1
    %1540 = vsyncpa [#allocation19], 1
    %1541 = vsyncpa [#allocation22], 1
    %1542 = vsyncpa [#allocation5], 1
    %s1543 = scalar_lea.sflag [#allocation5], 1
    %1544 = vsyncpa %s1543, 1
    %1545 = vsyncpa [#allocation25], 1
    %s1546 = scalar_lea.sflag [#allocation25], 1
    %1547 = vsyncpa %s1546, 1

</llo_original>
